<compile_context>
chip_gen: v5e
topology: v5e:2x2
jax: 0.10.0
libtpu: 0.0.40
codegen_flags: <defaults>
</compile_context>

<pallas_src>
import functools

import jax
import jax.numpy as jnp
from jax import lax
from jax.experimental import pallas as pl
from jax.experimental.pallas import tpu as pltpu


# -----------------------------------------------------------------------------
# small helpers
# -----------------------------------------------------------------------------
def _round_up(x, m):
    return (x + m - 1) // m * m


def _pad_axis(a, axis, target):
    if a.shape[axis] == target:
        return a
    widths = [(0, 0)] * a.ndim
    widths[axis] = (0, target - a.shape[axis])
    return jnp.pad(a, widths)


def _num_tensorcores_per_chip():
    # v7x has 2 TensorCores per chip ("parallel" grid axes are sharded across
    # them); v5e/v6e have 1. Best-effort detection, defaults to 1.
    try:
        kind = jax.devices()[0].device_kind.lower()
    except Exception:
        return 1
    return 2 if "v7" in kind else 1


_NUM_TC = _num_tensorcores_per_chip()


# -----------------------------------------------------------------------------
# Pallas kernels: fused matmul + bias + activation epilogue
# -----------------------------------------------------------------------------
def _epilogue(acc, act):
    if act == "relu":
        return jnp.maximum(acc, 0.0)
    if act == "sigmoid":
        return jax.nn.sigmoid(acc)
    return acc


def _mm_bias_kernel(x_ref, w_ref, b_ref, o_ref, *, act):
    acc = jnp.dot(x_ref[...], w_ref[...], preferred_element_type=jnp.float32)
    o_ref[...] = _epilogue(acc + b_ref[...], act).astype(o_ref.dtype)


def _mm_nobias_kernel(x_ref, w_ref, o_ref, *, act):
    acc = jnp.dot(x_ref[...], w_ref[...], preferred_element_type=jnp.float32)
    o_ref[...] = _epilogue(acc, act).astype(o_ref.dtype)


def _mm_bias_maskrelu_kernel(x_ref, w_ref, b_ref, m_ref, o_ref):
    # relu only where the precomputed (1, Np) mask row is 1 (the dec_fc half of
    # the fused dec_fc‖fc_py head); the fc_py logit columns pass through.
    acc = jnp.dot(x_ref[...], w_ref[...], preferred_element_type=jnp.float32)
    acc = acc + b_ref[...]
    o_ref[...] = jnp.where(m_ref[...] > 0.0, jnp.maximum(acc, 0.0), acc).astype(o_ref.dtype)


def pallas_linear(x, w, b=None, *, mask=None, act="none", n_out=None,
                  out_dtype=jnp.float32, block_m=512):
    """act(x @ w [+ b]) as one M-tiled Pallas call.

    x:    (M, K)  bf16, K at its natural size (full-extent K block, no HBM pad).
    w:    (K, Np) bf16, Np a multiple of 128 (padded columns are zero).
    b:    (1, Np) f32 or None (None skips the bias DMA + VPU add entirely).
    mask: (1, Np) f32 relu-column mask or None.
    Returns out[:M, :n_out] in out_dtype (bf16 for inter-layer activations).
    """
    M, K = x.shape
    Kw, Np = w.shape
    assert K == Kw and Np % 128 == 0
    n_out = Np if n_out is None else n_out

    # bf16 sublane packing -> multiples of 16; on 2-TC chips split small-M calls
    # into >= 2 tiles so both TensorCores get work.
    if _NUM_TC >= 2 and 16 < M <= block_m:
        bm = _round_up(pl.cdiv(M, _NUM_TC), 16)
    else:
        bm = min(block_m, _round_up(M, 16))
    Mp = _round_up(M, bm)
    xb = _pad_axis(x, 0, Mp)            # only M is padded (zeros), never K

    x_spec = pl.BlockSpec((bm, K), lambda i: (i, 0))       # K = full array extent
    w_spec = pl.BlockSpec((K, Np), lambda i: (0, 0))
    row_spec = pl.BlockSpec((1, Np), lambda i: (0, 0))

    if mask is not None:
        assert b is not None and act == "none"
        kernel, operands = _mm_bias_maskrelu_kernel, (xb, w, b, mask)
        in_specs = [x_spec, w_spec, row_spec, row_spec]
    elif b is not None:
        kernel, operands = functools.partial(_mm_bias_kernel, act=act), (xb, w, b)
        in_specs = [x_spec, w_spec, row_spec]
    else:
        kernel, operands = functools.partial(_mm_nobias_kernel, act=act), (xb, w)
        in_specs = [x_spec, w_spec]

    out_bytes = jnp.dtype(out_dtype).itemsize
    cost = pl.CostEstimate(                                # true shapes, not padded
        flops=2 * M * K * n_out,
        transcendentals=M * n_out if act == "sigmoid" else 0,
        bytes_accessed=(M * K * 2 + K * Np * 2
                        + (0 if b is None else Np * 4)
                        + (0 if mask is None else Np * 4)
                        + M * n_out * out_bytes),
    )

    out = pl.pallas_call(
        kernel,
        out_shape=jax.ShapeDtypeStruct((Mp, Np), out_dtype),
        grid_spec=pltpu.PrefetchScalarGridSpec(
            num_scalar_prefetch=0,
            grid=(Mp // bm,),
            in_specs=in_specs,
            out_specs=pl.BlockSpec((bm, Np), lambda i: (i, 0)),
        ),
        compiler_params=pltpu.CompilerParams(
            dimension_semantics=("parallel",),             # shard M across TCs (v7x)
        ),
        cost_estimate=cost,
    )(*operands)
    return out[:M, :n_out]


# -----------------------------------------------------------------------------
# Conv (NHWC): one patch-extraction op + fused Pallas matmul (bf16 out)
# -----------------------------------------------------------------------------
def conv2d_nhwc(x, wmat, bias_row, cout, kh, kw, stride, pad, act):
    N = x.shape[0]
    patches = lax.conv_general_dilated_patches(
        x, (kh, kw), (stride, stride), ((pad, pad), (pad, pad)),
        dimension_numbers=("NHWC", "HWIO", "NHWC"))
    _, oh, ow, KK = patches.shape
    assert KK == wmat.shape[0]
    out = pallas_linear(patches.reshape(N * oh * ow, KK), wmat, bias_row,
                        act=act, n_out=cout, out_dtype=jnp.bfloat16)
    return out.reshape(N, oh, ow, cout)


# -----------------------------------------------------------------------------
# ConvTranspose (NHWC): dense Pallas matmul + parity-grouped col2im (no scatter)
# -----------------------------------------------------------------------------
def conv_transpose2d_nhwc(x, wmat, bias, cout, kh, kw, stride, pad, act, out_dtype):
    """For k=4, s=2 the 16 kernel taps collapse into 4 parity planes; each plane
    is a sum of 4 one-pixel-shifted pads (overlap-free), and the planes are
    interleaved 2x2 (depth-to-space). No `.at[].add` read-modify-write chains."""
    N, H, W, Cin = x.shape
    assert stride == 2 and kh == 4 and kw == 4
    cols = pallas_linear(x.reshape(N * H * W, Cin), wmat, None,
                         n_out=kh * kw * cout, out_dtype=jnp.bfloat16)
    cols = cols.reshape(N, H, W, kh, kw, cout)

    def plane(pi, pj):   # (N, H+1, W+1, cout)
        return (jnp.pad(cols[:, :, :, pi,     pj,     :], ((0, 0), (0, 1), (0, 1), (0, 0)))
              + jnp.pad(cols[:, :, :, pi + 2, pj,     :], ((0, 0), (1, 0), (0, 1), (0, 0)))
              + jnp.pad(cols[:, :, :, pi,     pj + 2, :], ((0, 0), (0, 1), (1, 0), (0, 0)))
              + jnp.pad(cols[:, :, :, pi + 2, pj + 2, :], ((0, 0), (1, 0), (1, 0), (0, 0))))

    # full[:, 2m+pi, 2n+pj, :] = plane(pi, pj)[:, m, n, :]
    full = jnp.stack([jnp.stack([plane(pi, 0), plane(pi, 1)], axis=3)
                      for pi in range(2)], axis=2)
    full = full.reshape(N, 2 * (H + 1), 2 * (W + 1), cout)

    oh = (H - 1) * stride - 2 * pad + kh
    ow = (W - 1) * stride - 2 * pad + kw
    out = full[:, pad:pad + oh, pad:pad + ow, :] + bias.reshape(1, 1, 1, cout)  # -> f32
    if act == "relu":
        out = jnp.maximum(out, 0.0)
    elif act == "sigmoid":
        out = jax.nn.sigmoid(out)
    return out.astype(out_dtype)


# -----------------------------------------------------------------------------
# Parameters: synthetic PyTorch-layout init + one-time re-layout (hoisted)
# -----------------------------------------------------------------------------
def init_params_torch_layout(key, hc, dimZ, num_labels=10, image_size=28,
                             num_channels=1, scale=0.05):
    # conv/deconv weights in PyTorch layout; FC weights stored (in, out).
    flat = 2 * hc * (image_size // 4) ** 2
    ks = jax.random.split(key, 16)
    w = lambda k, s: scale * jax.random.normal(k, s, dtype=jnp.float32)
    return dict(
        conv1_w=w(ks[0], (hc, num_channels, 4, 4)),    conv1_b=w(ks[1], (hc,)),
        conv2_w=w(ks[2], (2 * hc, hc, 4, 4)),          conv2_b=w(ks[3], (2 * hc,)),
        fc_mu_w=w(ks[4], (flat + num_labels, dimZ)),   fc_mu_b=w(ks[5], (dimZ,)),
        fc_lv_w=w(ks[6], (flat + num_labels, dimZ)),   fc_lv_b=w(ks[7], (dimZ,)),
        dec_fc_w=w(ks[8], (dimZ, flat)),               dec_fc_b=w(ks[9], (flat,)),
        deconv1_w=w(ks[10], (2 * hc, hc, 4, 4)),       deconv1_b=w(ks[11], (hc,)),
        deconv2_w=w(ks[12], (hc, num_channels, 4, 4)), deconv2_b=w(ks[13], (num_channels,)),
        fc_py_w=w(ks[14], (dimZ, num_labels)),         fc_py_b=w(ks[15], (num_labels,)),
    )


def _patch_feature_permutation(C, kh, kw):
    """perm so that patches feature f == row perm[f] of a (c,i,j)-ordered im2col
    weight matrix. Probed numerically once, so the weight layout is robust to
    lax.conv_general_dilated_patches' feature ordering."""
    enc = jnp.arange(C * kh * kw, dtype=jnp.float32).reshape(C, kh, kw)
    probe = jnp.transpose(enc, (1, 2, 0))[None]          # probe[0,i,j,c] = id(c,i,j)
    feat = lax.conv_general_dilated_patches(
        probe, (kh, kw), (1, 1), ((0, 0), (0, 0)),
        dimension_numbers=("NHWC", "HWIO", "NHWC")).reshape(-1)
    return feat.astype(jnp.int32)


def prepare_params(tp):
    """One-time weight re-layout, bf16 cast and N(lane) padding, hoisted out of
    the jitted forward. K dims stay at their natural size (no activation K pad)."""
    def conv_wm_and_bias(w, b):
        O, C, kh, kw = w.shape
        m = jnp.transpose(w, (1, 2, 3, 0)).reshape(C * kh * kw, O)   # rows (c,i,j)
        m = m[_patch_feature_permutation(C, kh, kw)]                 # match patch order
        Np = _round_up(O, 128)
        return (_pad_axis(m, 1, Np).astype(jnp.bfloat16),
                _pad_axis(b.reshape(1, O).astype(jnp.float32), 1, Np))

    def deconv_wm(w):                                    # (Cin,Cout,kh,kw) -> (Cin, (i,j,o))
        Cin, Cout, kh, kw = w.shape
        m = jnp.transpose(w, (0, 2, 3, 1)).reshape(Cin, kh * kw * Cout)
        return _pad_axis(m, 1, _round_up(kh * kw * Cout, 128)).astype(jnp.bfloat16)

    conv1_wm, conv1_b = conv_wm_and_bias(tp["conv1_w"], tp["conv1_b"])
    conv2_wm, conv2_b = conv_wm_and_bias(tp["conv2_w"], tp["conv2_b"])

    # fused mu ‖ logvar head
    mulv_w = jnp.concatenate([tp["fc_mu_w"], tp["fc_lv_w"]], axis=1)
    mulv_b = jnp.concatenate([tp["fc_mu_b"], tp["fc_lv_b"]])
    Np = _round_up(mulv_w.shape[1], 128)
    fc_mulv_wm = _pad_axis(mulv_w, 1, Np).astype(jnp.bfloat16)
    fc_mulv_b = _pad_axis(mulv_b.reshape(1, -1).astype(jnp.float32), 1, Np)

    # fused dec_fc ‖ fc_py head, plus a per-column relu mask (replaces in-kernel iota)
    flat = tp["dec_fc_w"].shape[1]
    dec_w = jnp.concatenate([tp["dec_fc_w"], tp["fc_py_w"]], axis=1)
    dec_b = jnp.concatenate([tp["dec_fc_b"], tp["fc_py_b"]])
    Np = _round_up(dec_w.shape[1], 128)
    dec_wm = _pad_axis(dec_w, 1, Np).astype(jnp.bfloat16)
    dec_bb = _pad_axis(dec_b.reshape(1, -1).astype(jnp.float32), 1, Np)
    dec_mask = _pad_axis(
        jnp.concatenate([jnp.ones((1, flat), jnp.float32),
                         jnp.zeros((1, dec_w.shape[1] - flat), jnp.float32)], axis=1),
        1, Np)

    return dict(
        conv1_wm=conv1_wm, conv1_b=conv1_b,
        conv2_wm=conv2_wm, conv2_b=conv2_b,
        fc_mulv_wm=fc_mulv_wm, fc_mulv_b=fc_mulv_b,
        dec_wm=dec_wm, dec_b=dec_bb, dec_mask=dec_mask,
        deconv1_wm=deconv_wm(tp["deconv1_w"]), deconv1_b=tp["deconv1_b"].astype(jnp.float32),
        deconv2_wm=deconv_wm(tp["deconv2_w"]), deconv2_b=tp["deconv2_b"].astype(jnp.float32),
    )


# -----------------------------------------------------------------------------
# BayesModel.forward(x, y) -> (x_recon, y_pred, latent_mu, latent_logvar)
# use_mean=True -> latent = latent_mu (no sampling).
# -----------------------------------------------------------------------------
def bayes_model_forward(p, x_nchw, y, *, hidden_channels, dimZ, num_labels=10):
    hc = hidden_channels
    N = x_nchw.shape[0]
    x = jnp.transpose(x_nchw, (0, 2, 3, 1)).astype(jnp.bfloat16)       # NHWC + bf16 once

    # --- encoder(x, y) -> mu, logvar ---
    h1 = conv2d_nhwc(x, p["conv1_wm"], p["conv1_b"], hc, 4, 4, 2, 1, "relu")       # (N,14,14,hc)
    h2 = conv2d_nhwc(h1, p["conv2_wm"], p["conv2_b"], 2 * hc, 4, 4, 2, 1, "relu")  # (N,7,7,2hc)
    fh, fw, fch = h2.shape[1:]
    flat = fh * fw * fch
    hy = jnp.concatenate([h2.reshape(N, flat), y.astype(jnp.bfloat16)], axis=1)

    mulv = pallas_linear(hy, p["fc_mulv_wm"], p["fc_mulv_b"],
                         n_out=2 * dimZ, out_dtype=jnp.float32)        # (N, 2*dimZ)
    latent_mu, latent_logvar = mulv[:, :dimZ], mulv[:, dimZ:]
    latent = latent_mu                                                 # use_mean=True

    # --- decoder(latent) -> x_recon, y_pred ---
    dh = pallas_linear(latent.astype(jnp.bfloat16), p["dec_wm"], p["dec_b"],
                       mask=p["dec_mask"], n_out=flat + num_labels,
                       out_dtype=jnp.bfloat16)                         # (N, flat+10)
    d = dh[:, :flat].reshape(N, fh, fw, fch)
    y_pred = dh[:, flat:].astype(jnp.float32)

    d = conv_transpose2d_nhwc(d, p["deconv1_wm"], p["deconv1_b"],
                              hc, 4, 4, 2, 1, "relu", jnp.bfloat16)    # (N,14,14,hc)
    xr = conv_transpose2d_nhwc(d, p["deconv2_wm"], p["deconv2_b"],
                               1, 4, 4, 2, 1, "sigmoid", jnp.float32)  # (N,28,28,1)
    x_recon = jnp.transpose(xr, (0, 3, 1, 2))                          # back to NCHW once
    return x_recon, y_pred, latent_mu, latent_logvar


# -----------------------------------------------------------------------------
# Pure-XLA f32 reference (validates patch ordering, weight re-layout, parity
# col2im and the Pallas matmul epilogues).
# -----------------------------------------------------------------------------
def reference_forward(tp, x_nchw, y):
    x = jnp.transpose(x_nchw, (0, 2, 3, 1)).astype(jnp.float32)
    N = x.shape[0]

    def conv(x, w, b, stride, pad):
        w_hwio = jnp.transpose(w, (2, 3, 1, 0))
        o = lax.conv_general_dilated(x, w_hwio, (stride, stride),
                                     ((pad, pad), (pad, pad)),
                                     dimension_numbers=("NHWC", "HWIO", "NHWC"))
        return o + b.reshape(1, 1, 1, -1)

    def deconv(x, w, b, stride, pad):                      # direct ConvTranspose2d
        N_, H, W, _ = x.shape
        _, Cout, kh, kw = w.shape
        cols = jnp.einsum('nhwc,coij->nhwijo', x, w)
        acc = jnp.zeros((N_, (H - 1) * stride + kh, (W - 1) * stride + kw, Cout),
                        jnp.float32)
        for i in range(kh):
            for j in range(kw):
                acc = acc.at[:, i:i + (H - 1) * stride + 1:stride,
                                j:j + (W - 1) * stride + 1:stride, :].add(cols[:, :, :, i, j, :])
        oh = (H - 1) * stride - 2 * pad + kh
        ow = (W - 1) * stride - 2 * pad + kw
        return acc[:, pad:pad + oh, pad:pad + ow, :] + b.reshape(1, 1, 1, -1)

    h1 = jax.nn.relu(conv(x, tp["conv1_w"], tp["conv1_b"], 2, 1))
    h2 = jax.nn.relu(conv(h1, tp["conv2_w"], tp["conv2_b"], 2, 1))
    fh, fw, fch = h2.shape[1:]
    flat = fh * fw * fch
    hy = jnp.concatenate([h2.reshape(N, flat), y], axis=1)
    mu = hy @ tp["fc_mu_w"] + tp["fc_mu_b"]
    logvar = hy @ tp["fc_lv_w"] + tp["fc_lv_b"]
    d = jax.nn.relu(mu @ tp["dec_fc_w"] + tp["dec_fc_b"]).reshape(N, fh, fw, fch)
    y_pred = mu @ tp["fc_py_w"] + tp["fc_py_b"]
    d = jax.nn.relu(deconv(d, tp["deconv1_w"], tp["deconv1_b"], 2, 1))
    xr = jax.nn.sigmoid(deconv(d, tp["deconv2_w"], tp["deconv2_b"], 2, 1))
    return jnp.transpose(xr, (0, 3, 1, 2)), y_pred, mu, logvar


# -----------------------------------------------------------------------------
if __name__ == "__main__":
    hidden_channels, dimZ, num_labels = 8, 32, 10
    batch = 2

    key = jax.random.PRNGKey(0)
    kp, kx, ky = jax.random.split(key, 3)

    torch_params = init_params_torch_layout(kp, hidden_channels, dimZ, num_labels)
    params = prepare_params(torch_params)                 # one-time, outside jit
    x = jax.random.uniform(kx, (batch, 1, 28, 28), dtype=jnp.float32)   # NCHW mnist-like
    labels = jax.random.randint(ky, (batch,), 0, num_labels)
    y = jax.nn.one_hot(labels, num_labels, dtype=jnp.float32)

    fwd = jax.jit(functools.partial(bayes_model_forward, hidden_channels=hidden_channels,
                                    dimZ=dimZ, num_labels=num_labels))
    x_recon, y_pred, mu, logvar = fwd(params, x, y)
    jax.block_until_ready((x_recon, y_pred, mu, logvar))

    assert x_recon.shape == (batch, 1, 28, 28)
    assert y_pred.shape == (batch, num_labels)
    assert mu.shape == (batch, dimZ)
    assert logvar.shape == (batch, dimZ)
    assert bool(jnp.all(jnp.isfinite(x_recon)))
    assert bool(jnp.all(jnp.isfinite(y_pred)))

    # numerical check vs a pure-f32 XLA reference (bf16 MXU path -> loose tol)
    xr_r, yp_r, mu_r, lv_r = jax.jit(reference_forward)(torch_params, x, y)
    assert bool(jnp.allclose(mu, mu_r, rtol=5e-2, atol=5e-2)), "mu mismatch"
    assert bool(jnp.allclose(logvar, lv_r, rtol=5e-2, atol=5e-2)), "logvar mismatch"
    assert bool(jnp.allclose(y_pred, yp_r, rtol=5e-2, atol=5e-2)), "y_pred mismatch"
    assert bool(jnp.allclose(x_recon, xr_r, rtol=5e-2, atol=5e-2)), "x_recon mismatch"

    print("KERNEL_OK")
</pallas_src>

<mosaic_0001>
module attributes {stable_mosaic.version = 11 : i64} {
  func.func @_mm_bias_kernel(%arg0: i32, %arg1: memref<400x16xbf16, #tpu.memory_space<vmem>>, %arg2: memref<16x128xbf16, #tpu.memory_space<vmem>>, %arg3: memref<1x128xf32, #tpu.memory_space<vmem>>, %arg4: memref<400x128xbf16, #tpu.memory_space<vmem>>) attributes {dimension_semantics = [#tpu.dimension_semantics<parallel>], iteration_bounds = array<i64: 1>, scalar_prefetch = 0 : i64, scratch_operands = 0 : i64, tpu.core_type = #tpu.core_type<tc>, window_params = [{transform_indices = @transform_0, window_bounds = array<i64: 400, 16>}, {pipeline_mode = #tpu.pipeline_mode<synchronous>, transform_indices = @transform_1, window_bounds = array<i64: 16, 128>}, {pipeline_mode = #tpu.pipeline_mode<synchronous>, transform_indices = @transform_2, window_bounds = array<i64: 1, 128>}, {transform_indices = @transform_3, window_bounds = array<i64: 400, 128>}]} {
    %c0 = arith.constant 0 : index
    %c0_0 = arith.constant 0 : index
    %0 = vector.load %arg1[%c0, %c0_0] : memref<400x16xbf16, #tpu.memory_space<vmem>>, vector<400x16xbf16>
    %c0_1 = arith.constant 0 : index
    %c0_2 = arith.constant 0 : index
    %1 = vector.load %arg2[%c0_1, %c0_2] : memref<16x128xbf16, #tpu.memory_space<vmem>>, vector<16x128xbf16>
    %cst = arith.constant dense<0.000000e+00> : vector<400x128xf32>
    %2 = tpu.matmul %0, %1, %cst {dimension_numbers = #tpu.dot_dimension_numbers<[1], [0], [0], [1], [0, 0, 1, 1], [], []>} : vector<400x16xbf16>, vector<16x128xbf16>, vector<400x128xf32> -> vector<400x128xf32>
    %c0_3 = arith.constant 0 : index
    %c0_4 = arith.constant 0 : index
    %3 = vector.load %arg3[%c0_3, %c0_4] : memref<1x128xf32, #tpu.memory_space<vmem>>, vector<1x128xf32>
    %4 = vector.broadcast %3 : vector<1x128xf32> to vector<400x128xf32>
    %5 = arith.addf %2, %4 : vector<400x128xf32>
    %cst_5 = arith.constant 0.000000e+00 : f32
    %6 = vector.broadcast %cst_5 : f32 to vector<400x128xf32>
    %7 = arith.maximumf %5, %6 : vector<400x128xf32>
    %8 = arith.truncf %7 : vector<400x128xf32> to vector<400x128xbf16>
    %c0_6 = arith.constant 0 : index
    %c0_7 = arith.constant 0 : index
    %9 = vector.load %arg4[%c0_6, %c0_7] : memref<400x128xbf16, #tpu.memory_space<vmem>>, vector<400x128xbf16>
    tpu.vector_store %arg4[%c0_6, %c0_7], %8 {strides = array<i32>} : memref<400x128xbf16, #tpu.memory_space<vmem>>, vector<400x128xbf16>,
    return
  }
  func.func @transform_0(%arg0: i32) -> (i32, i32) {
    %c0_i32 = arith.constant 0 : i32
    %c0_i32_0 = arith.constant 0 : i32
    return %arg0, %c0_i32 : i32, i32
  }
  func.func @transform_1(%arg0: i32) -> (i32, i32) {
    %c0_i32 = arith.constant 0 : i32
    %c0_i32_0 = arith.constant 0 : i32
    %c0_i32_1 = arith.constant 0 : i32
    return %c0_i32, %c0_i32_0 : i32, i32
  }
  func.func @transform_2(%arg0: i32) -> (i32, i32) {
    %c0_i32 = arith.constant 0 : i32
    %c0_i32_0 = arith.constant 0 : i32
    %c0_i32_1 = arith.constant 0 : i32
    return %c0_i32, %c0_i32_0 : i32, i32
  }
  func.func @transform_3(%arg0: i32) -> (i32, i32) {
    %c0_i32 = arith.constant 0 : i32
    %c0_i32_0 = arith.constant 0 : i32
    return %arg0, %c0_i32 : i32, i32
  }
}

module attributes {stable_mosaic.version = 11 : i64} {
  func.func @_mm_bias_kernel(%arg0: i32, %arg1: memref<112x128xbf16, #tpu.memory_space<vmem>>, %arg2: memref<128x128xbf16, #tpu.memory_space<vmem>>, %arg3: memref<1x128xf32, #tpu.memory_space<vmem>>, %arg4: memref<112x128xbf16, #tpu.memory_space<vmem>>) attributes {dimension_semantics = [#tpu.dimension_semantics<parallel>], iteration_bounds = array<i64: 1>, scalar_prefetch = 0 : i64, scratch_operands = 0 : i64, tpu.core_type = #tpu.core_type<tc>, window_params = [{transform_indices = @transform_0, window_bounds = array<i64: 112, 128>}, {pipeline_mode = #tpu.pipeline_mode<synchronous>, transform_indices = @transform_1, window_bounds = array<i64: 128, 128>}, {pipeline_mode = #tpu.pipeline_mode<synchronous>, transform_indices = @transform_2, window_bounds = array<i64: 1, 128>}, {transform_indices = @transform_3, window_bounds = array<i64: 112, 128>}]} {
    %c0 = arith.constant 0 : index
    %c0_0 = arith.constant 0 : index
    %0 = vector.load %arg1[%c0, %c0_0] : memref<112x128xbf16, #tpu.memory_space<vmem>>, vector<112x128xbf16>
    %c0_1 = arith.constant 0 : index
    %c0_2 = arith.constant 0 : index
    %1 = vector.load %arg2[%c0_1, %c0_2] : memref<128x128xbf16, #tpu.memory_space<vmem>>, vector<128x128xbf16>
    %cst = arith.constant dense<0.000000e+00> : vector<112x128xf32>
    %2 = tpu.matmul %0, %1, %cst {dimension_numbers = #tpu.dot_dimension_numbers<[1], [0], [0], [1], [0, 0, 1, 1], [], []>} : vector<112x128xbf16>, vector<128x128xbf16>, vector<112x128xf32> -> vector<112x128xf32>
    %c0_3 = arith.constant 0 : index
    %c0_4 = arith.constant 0 : index
    %3 = vector.load %arg3[%c0_3, %c0_4] : memref<1x128xf32, #tpu.memory_space<vmem>>, vector<1x128xf32>
    %4 = vector.broadcast %3 : vector<1x128xf32> to vector<112x128xf32>
    %5 = arith.addf %2, %4 : vector<112x128xf32>
    %cst_5 = arith.constant 0.000000e+00 : f32
    %6 = vector.broadcast %cst_5 : f32 to vector<112x128xf32>
    %7 = arith.maximumf %5, %6 : vector<112x128xf32>
    %8 = arith.truncf %7 : vector<112x128xf32> to vector<112x128xbf16>
    %c0_6 = arith.constant 0 : index
    %c0_7 = arith.constant 0 : index
    %9 = vector.load %arg4[%c0_6, %c0_7] : memref<112x128xbf16, #tpu.memory_space<vmem>>, vector<112x128xbf16>
    tpu.vector_store %arg4[%c0_6, %c0_7], %8 {strides = array<i32>} : memref<112x128xbf16, #tpu.memory_space<vmem>>, vector<112x128xbf16>,
    return
  }
  func.func @transform_0(%arg0: i32) -> (i32, i32) {
    %c0_i32 = arith.constant 0 : i32
    %c0_i32_0 = arith.constant 0 : i32
    return %arg0, %c0_i32 : i32, i32
  }
  func.func @transform_1(%arg0: i32) -> (i32, i32) {
    %c0_i32 = arith.constant 0 : i32
    %c0_i32_0 = arith.constant 0 : i32
    %c0_i32_1 = arith.constant 0 : i32
    return %c0_i32, %c0_i32_0 : i32, i32
  }
  func.func @transform_2(%arg0: i32) -> (i32, i32) {
    %c0_i32 = arith.constant 0 : i32
    %c0_i32_0 = arith.constant 0 : i32
    %c0_i32_1 = arith.constant 0 : i32
    return %c0_i32, %c0_i32_0 : i32, i32
  }
  func.func @transform_3(%arg0: i32) -> (i32, i32) {
    %c0_i32 = arith.constant 0 : i32
    %c0_i32_0 = arith.constant 0 : i32
    return %arg0, %c0_i32 : i32, i32
  }
}

module attributes {stable_mosaic.version = 11 : i64} {
  func.func @_mm_bias_kernel(%arg0: i32, %arg1: memref<16x794xbf16, #tpu.memory_space<vmem>>, %arg2: memref<794x128xbf16, #tpu.memory_space<vmem>>, %arg3: memref<1x128xf32, #tpu.memory_space<vmem>>, %arg4: memref<16x128xf32, #tpu.memory_space<vmem>>) attributes {dimension_semantics = [#tpu.dimension_semantics<parallel>], iteration_bounds = array<i64: 1>, scalar_prefetch = 0 : i64, scratch_operands = 0 : i64, tpu.core_type = #tpu.core_type<tc>, window_params = [{transform_indices = @transform_0, window_bounds = array<i64: 16, 794>}, {pipeline_mode = #tpu.pipeline_mode<synchronous>, transform_indices = @transform_1, window_bounds = array<i64: 794, 128>}, {pipeline_mode = #tpu.pipeline_mode<synchronous>, transform_indices = @transform_2, window_bounds = array<i64: 1, 128>}, {transform_indices = @transform_3, window_bounds = array<i64: 16, 128>}]} {
    %c0 = arith.constant 0 : index
    %c0_0 = arith.constant 0 : index
    %0 = vector.load %arg1[%c0, %c0_0] : memref<16x794xbf16, #tpu.memory_space<vmem>>, vector<16x794xbf16>
    %c0_1 = arith.constant 0 : index
    %c0_2 = arith.constant 0 : index
    %1 = vector.load %arg2[%c0_1, %c0_2] : memref<794x128xbf16, #tpu.memory_space<vmem>>, vector<794x128xbf16>
    %cst = arith.constant dense<0.000000e+00> : vector<16x128xf32>
    %2 = tpu.matmul %0, %1, %cst {dimension_numbers = #tpu.dot_dimension_numbers<[1], [0], [0], [1], [0, 0, 1, 1], [], []>} : vector<16x794xbf16>, vector<794x128xbf16>, vector<16x128xf32> -> vector<16x128xf32>
    %c0_3 = arith.constant 0 : index
    %c0_4 = arith.constant 0 : index
    %3 = vector.load %arg3[%c0_3, %c0_4] : memref<1x128xf32, #tpu.memory_space<vmem>>, vector<1x128xf32>
    %4 = vector.broadcast %3 : vector<1x128xf32> to vector<16x128xf32>
    %5 = arith.addf %2, %4 : vector<16x128xf32>
    %c0_5 = arith.constant 0 : index
    %c0_6 = arith.constant 0 : index
    %6 = vector.load %arg4[%c0_5, %c0_6] : memref<16x128xf32, #tpu.memory_space<vmem>>, vector<16x128xf32>
    tpu.vector_store %arg4[%c0_5, %c0_6], %5 {strides = array<i32>} : memref<16x128xf32, #tpu.memory_space<vmem>>, vector<16x128xf32>,
    return
  }
  func.func @transform_0(%arg0: i32) -> (i32, i32) {
    %c0_i32 = arith.constant 0 : i32
    %c0_i32_0 = arith.constant 0 : i32
    return %arg0, %c0_i32 : i32, i32
  }
  func.func @transform_1(%arg0: i32) -> (i32, i32) {
    %c0_i32 = arith.constant 0 : i32
    %c0_i32_0 = arith.constant 0 : i32
    %c0_i32_1 = arith.constant 0 : i32
    return %c0_i32, %c0_i32_0 : i32, i32
  }
  func.func @transform_2(%arg0: i32) -> (i32, i32) {
    %c0_i32 = arith.constant 0 : i32
    %c0_i32_0 = arith.constant 0 : i32
    %c0_i32_1 = arith.constant 0 : i32
    return %c0_i32, %c0_i32_0 : i32, i32
  }
  func.func @transform_3(%arg0: i32) -> (i32, i32) {
    %c0_i32 = arith.constant 0 : i32
    %c0_i32_0 = arith.constant 0 : i32
    return %arg0, %c0_i32 : i32, i32
  }
}

module attributes {stable_mosaic.version = 11 : i64} {
  func.func @_mm_bias_maskrelu_kernel(%arg0: i32, %arg1: memref<16x32xbf16, #tpu.memory_space<vmem>>, %arg2: memref<32x896xbf16, #tpu.memory_space<vmem>>, %arg3: memref<1x896xf32, #tpu.memory_space<vmem>>, %arg4: memref<1x896xf32, #tpu.memory_space<vmem>>, %arg5: memref<16x896xbf16, #tpu.memory_space<vmem>>) attributes {dimension_semantics = [#tpu.dimension_semantics<parallel>], iteration_bounds = array<i64: 1>, scalar_prefetch = 0 : i64, scratch_operands = 0 : i64, tpu.core_type = #tpu.core_type<tc>, window_params = [{transform_indices = @transform_0, window_bounds = array<i64: 16, 32>}, {pipeline_mode = #tpu.pipeline_mode<synchronous>, transform_indices = @transform_1, window_bounds = array<i64: 32, 896>}, {pipeline_mode = #tpu.pipeline_mode<synchronous>, transform_indices = @transform_2, window_bounds = array<i64: 1, 896>}, {pipeline_mode = #tpu.pipeline_mode<synchronous>, transform_indices = @transform_3, window_bounds = array<i64: 1, 896>}, {transform_indices = @transform_4, window_bounds = array<i64: 16, 896>}]} {
    %c0 = arith.constant 0 : index
    %c0_0 = arith.constant 0 : index
    %0 = vector.load %arg1[%c0, %c0_0] : memref<16x32xbf16, #tpu.memory_space<vmem>>, vector<16x32xbf16>
    %c0_1 = arith.constant 0 : index
    %c0_2 = arith.constant 0 : index
    %1 = vector.load %arg2[%c0_1, %c0_2] : memref<32x896xbf16, #tpu.memory_space<vmem>>, vector<32x896xbf16>
    %cst = arith.constant dense<0.000000e+00> : vector<16x896xf32>
    %2 = tpu.matmul %0, %1, %cst {dimension_numbers = #tpu.dot_dimension_numbers<[1], [0], [0], [1], [0, 0, 1, 1], [], []>} : vector<16x32xbf16>, vector<32x896xbf16>, vector<16x896xf32> -> vector<16x896xf32>
    %c0_3 = arith.constant 0 : index
    %c0_4 = arith.constant 0 : index
    %3 = vector.load %arg3[%c0_3, %c0_4] : memref<1x896xf32, #tpu.memory_space<vmem>>, vector<1x896xf32>
    %4 = vector.broadcast %3 : vector<1x896xf32> to vector<16x896xf32>
    %5 = arith.addf %2, %4 : vector<16x896xf32>
    %c0_5 = arith.constant 0 : index
    %c0_6 = arith.constant 0 : index
    %6 = vector.load %arg4[%c0_5, %c0_6] : memref<1x896xf32, #tpu.memory_space<vmem>>, vector<1x896xf32>
    %cst_7 = arith.constant 0.000000e+00 : f32
    %7 = vector.broadcast %cst_7 : f32 to vector<1x896xf32>
    %8 = arith.cmpf ogt, %6, %7 : vector<1x896xf32>
    %cst_8 = arith.constant 0.000000e+00 : f32
    %9 = vector.broadcast %cst_8 : f32 to vector<16x896xf32>
    %10 = arith.maximumf %5, %9 : vector<16x896xf32>
    %11 = vector.shape_cast %8 : vector<1x896xi1> to vector<1x896xi1>
    %12 = vector.broadcast %11 : vector<1x896xi1> to vector<16x896xi1>
    %13 = arith.select %12, %10, %5 : vector<16x896xi1>, vector<16x896xf32>
    %14 = arith.truncf %13 : vector<16x896xf32> to vector<16x896xbf16>
    %c0_9 = arith.constant 0 : index
    %c0_10 = arith.constant 0 : index
    %15 = vector.load %arg5[%c0_9, %c0_10] : memref<16x896xbf16, #tpu.memory_space<vmem>>, vector<16x896xbf16>
    tpu.vector_store %arg5[%c0_9, %c0_10], %14 {strides = array<i32>} : memref<16x896xbf16, #tpu.memory_space<vmem>>, vector<16x896xbf16>,
    return
  }
  func.func @transform_0(%arg0: i32) -> (i32, i32) {
    %c0_i32 = arith.constant 0 : i32
    %c0_i32_0 = arith.constant 0 : i32
    return %arg0, %c0_i32 : i32, i32
  }
  func.func @transform_1(%arg0: i32) -> (i32, i32) {
    %c0_i32 = arith.constant 0 : i32
    %c0_i32_0 = arith.constant 0 : i32
    %c0_i32_1 = arith.constant 0 : i32
    return %c0_i32, %c0_i32_0 : i32, i32
  }
  func.func @transform_2(%arg0: i32) -> (i32, i32) {
    %c0_i32 = arith.constant 0 : i32
    %c0_i32_0 = arith.constant 0 : i32
    %c0_i32_1 = arith.constant 0 : i32
    return %c0_i32, %c0_i32_0 : i32, i32
  }
  func.func @transform_3(%arg0: i32) -> (i32, i32) {
    %c0_i32 = arith.constant 0 : i32
    %c0_i32_0 = arith.constant 0 : i32
    %c0_i32_1 = arith.constant 0 : i32
    return %c0_i32, %c0_i32_0 : i32, i32
  }
  func.func @transform_4(%arg0: i32) -> (i32, i32) {
    %c0_i32 = arith.constant 0 : i32
    %c0_i32_0 = arith.constant 0 : i32
    return %arg0, %c0_i32 : i32, i32
  }
}

module attributes {stable_mosaic.version = 11 : i64} {
  func.func @_mm_nobias_kernel(%arg0: i32, %arg1: memref<112x16xbf16, #tpu.memory_space<vmem>>, %arg2: memref<16x128xbf16, #tpu.memory_space<vmem>>, %arg3: memref<112x128xbf16, #tpu.memory_space<vmem>>) attributes {dimension_semantics = [#tpu.dimension_semantics<parallel>], iteration_bounds = array<i64: 1>, scalar_prefetch = 0 : i64, scratch_operands = 0 : i64, tpu.core_type = #tpu.core_type<tc>, window_params = [{transform_indices = @transform_0, window_bounds = array<i64: 112, 16>}, {pipeline_mode = #tpu.pipeline_mode<synchronous>, transform_indices = @transform_1, window_bounds = array<i64: 16, 128>}, {transform_indices = @transform_2, window_bounds = array<i64: 112, 128>}]} {
    %c0 = arith.constant 0 : index
    %c0_0 = arith.constant 0 : index
    %0 = vector.load %arg1[%c0, %c0_0] : memref<112x16xbf16, #tpu.memory_space<vmem>>, vector<112x16xbf16>
    %c0_1 = arith.constant 0 : index
    %c0_2 = arith.constant 0 : index
    %1 = vector.load %arg2[%c0_1, %c0_2] : memref<16x128xbf16, #tpu.memory_space<vmem>>, vector<16x128xbf16>
    %cst = arith.constant dense<0.000000e+00> : vector<112x128xf32>
    %2 = tpu.matmul %0, %1, %cst {dimension_numbers = #tpu.dot_dimension_numbers<[1], [0], [0], [1], [0, 0, 1, 1], [], []>} : vector<112x16xbf16>, vector<16x128xbf16>, vector<112x128xf32> -> vector<112x128xf32>
    %3 = arith.truncf %2 : vector<112x128xf32> to vector<112x128xbf16>
    %c0_3 = arith.constant 0 : index
    %c0_4 = arith.constant 0 : index
    %4 = vector.load %arg3[%c0_3, %c0_4] : memref<112x128xbf16, #tpu.memory_space<vmem>>, vector<112x128xbf16>
    tpu.vector_store %arg3[%c0_3, %c0_4], %3 {strides = array<i32>} : memref<112x128xbf16, #tpu.memory_space<vmem>>, vector<112x128xbf16>,
    return
  }
  func.func @transform_0(%arg0: i32) -> (i32, i32) {
    %c0_i32 = arith.constant 0 : i32
    %c0_i32_0 = arith.constant 0 : i32
    return %arg0, %c0_i32 : i32, i32
  }
  func.func @transform_1(%arg0: i32) -> (i32, i32) {
    %c0_i32 = arith.constant 0 : i32
    %c0_i32_0 = arith.constant 0 : i32
    %c0_i32_1 = arith.constant 0 : i32
    return %c0_i32, %c0_i32_0 : i32, i32
  }
  func.func @transform_2(%arg0: i32) -> (i32, i32) {
    %c0_i32 = arith.constant 0 : i32
    %c0_i32_0 = arith.constant 0 : i32
    return %arg0, %c0_i32 : i32, i32
  }
}

module attributes {stable_mosaic.version = 11 : i64} {
  func.func @_mm_nobias_kernel(%arg0: i32, %arg1: memref<400x8xbf16, #tpu.memory_space<vmem>>, %arg2: memref<8x128xbf16, #tpu.memory_space<vmem>>, %arg3: memref<400x128xbf16, #tpu.memory_space<vmem>>) attributes {dimension_semantics = [#tpu.dimension_semantics<parallel>], iteration_bounds = array<i64: 1>, scalar_prefetch = 0 : i64, scratch_operands = 0 : i64, tpu.core_type = #tpu.core_type<tc>, window_params = [{transform_indices = @transform_0, window_bounds = array<i64: 400, 8>}, {pipeline_mode = #tpu.pipeline_mode<synchronous>, transform_indices = @transform_1, window_bounds = array<i64: 8, 128>}, {transform_indices = @transform_2, window_bounds = array<i64: 400, 128>}]} {
    %c0 = arith.constant 0 : index
    %c0_0 = arith.constant 0 : index
    %0 = vector.load %arg1[%c0, %c0_0] : memref<400x8xbf16, #tpu.memory_space<vmem>>, vector<400x8xbf16>
    %c0_1 = arith.constant 0 : index
    %c0_2 = arith.constant 0 : index
    %1 = vector.load %arg2[%c0_1, %c0_2] : memref<8x128xbf16, #tpu.memory_space<vmem>>, vector<8x128xbf16>
    %cst = arith.constant dense<0.000000e+00> : vector<400x128xf32>
    %2 = tpu.matmul %0, %1, %cst {dimension_numbers = #tpu.dot_dimension_numbers<[1], [0], [0], [1], [0, 0, 1, 1], [], []>} : vector<400x8xbf16>, vector<8x128xbf16>, vector<400x128xf32> -> vector<400x128xf32>
    %3 = arith.truncf %2 : vector<400x128xf32> to vector<400x128xbf16>
    %c0_3 = arith.constant 0 : index
    %c0_4 = arith.constant 0 : index
    %4 = vector.load %arg3[%c0_3, %c0_4] : memref<400x128xbf16, #tpu.memory_space<vmem>>, vector<400x128xbf16>
    tpu.vector_store %arg3[%c0_3, %c0_4], %3 {strides = array<i32>} : memref<400x128xbf16, #tpu.memory_space<vmem>>, vector<400x128xbf16>,
    return
  }
  func.func @transform_0(%arg0: i32) -> (i32, i32) {
    %c0_i32 = arith.constant 0 : i32
    %c0_i32_0 = arith.constant 0 : i32
    return %arg0, %c0_i32 : i32, i32
  }
  func.func @transform_1(%arg0: i32) -> (i32, i32) {
    %c0_i32 = arith.constant 0 : i32
    %c0_i32_0 = arith.constant 0 : i32
    %c0_i32_1 = arith.constant 0 : i32
    return %c0_i32, %c0_i32_0 : i32, i32
  }
  func.func @transform_2(%arg0: i32) -> (i32, i32) {
    %c0_i32 = arith.constant 0 : i32
    %c0_i32_0 = arith.constant 0 : i32
    return %arg0, %c0_i32 : i32, i32
  }
}

</mosaic_0001>

<llo_original>
// kernel: bayes_model_forward.6
$region0: #{bayes_model_forward.6}
  #allocation0 [shape = 'u32[]', space=smem, size = 0x4, offset = 0x4, fixed_abs, tag = 'smem constant byte address 0x4 - core index']
  #allocation1 [shape = 'u32[72,128]{1,0:T(1,128)}', space=vmem, size = 0x9000, scoped, tag = 'internal scratch']
  %s0 = inlined_call_operand.vmem [shape: bf16[400,16], index: 0, kind: input, shape index: {}]
  %s1 = inlined_call_operand.vmem [shape: bf16[16,128], index: 1, kind: input, shape index: {}]
  %s2 = inlined_call_operand.vmem [shape: f32[1,128], index: 2, kind: input, shape index: {}]
  %s3 = inlined_call_operand.vmem [shape: bf16[400,128], index: 3, kind: output, shape index: {}]
  %s4 = sld [smem:[#allocation0]]
  $region22: #{bayes_model_forward.6} parent=0
    _
  %s6 = ssub.s32 1, %s4
  %s7 = scalar_select 0, %s6, %s4
  // Predicated region
  $region2: #{bayes_model_forward.6} parent=0 // pred_check
    _
  $region3: #{bayes_model_forward.6} parent=0 // pred_check_branch
    %9 = sbr.rel (0) target = $region5
  $region4: #{bayes_model_forward.6} parent=0 // pred_region
    _
  $region5: #{bayes_model_forward.6} parent=0 // pred_fallthru
    _
  // Predicated region
  $region6: #{bayes_model_forward.6} parent=0 // pred_check
    _
  $region7: #{bayes_model_forward.6} parent=0 // pred_check_branch
    %11 = sbr.rel (0) target = $region9
  $region8: #{bayes_model_forward.6} parent=0 // pred_region
    _
  $region9: #{bayes_model_forward.6} parent=0 // pred_fallthru
    _
  // Predicated region
  $region10: #{bayes_model_forward.6} parent=0 // pred_check
    _
  $region11: #{bayes_model_forward.6} parent=0 // pred_check_branch
    %13 = sbr.rel (0) target = $region13
  $region12: #{bayes_model_forward.6} parent=0 // pred_region
    _
  $region13: #{bayes_model_forward.6} parent=0 // pred_fallthru
    _
  %v15 = vld [vmem:[%s0] sm:$0xf]
  %v16 = vld [vmem:[%s0 + $0x4] sm:$0xf]
  %v17 = vld [vmem:[%s0 + $0x8] sm:$0xf]
  %v18 = vld [vmem:[%s0 + $0xc] sm:$0xf]
  %v19 = vld [vmem:[%s0 + $0x10] sm:$0xf]
  %v20 = vld [vmem:[%s0 + $0x14] sm:$0xf]
  %v21 = vld [vmem:[%s0 + $0x18] sm:$0xf]
  %v22 = vld [vmem:[%s0 + $0x1c] sm:$0xf]
  %v23 = vld [vmem:[%s0 + $0x20] sm:$0xf]
  %v24 = vld [vmem:[%s0 + $0x24] sm:$0xf]
  %v25 = vld [vmem:[%s0 + $0x28] sm:$0xf]
  %v26 = vld [vmem:[%s0 + $0x2c] sm:$0xf]
  %v27 = vld [vmem:[%s0 + $0x30] sm:$0xf]
  %v28 = vld [vmem:[%s0 + $0x34] sm:$0xf]
  %v29 = vld [vmem:[%s0 + $0x38] sm:$0xf]
  %v30 = vld [vmem:[%s0 + $0x3c] sm:$0xf]
  %v31 = vld [vmem:[%s0 + $0x40] sm:$0xf]
  %v32 = vld [vmem:[%s0 + $0x44] sm:$0xf]
  %v33 = vld [vmem:[%s0 + $0x48] sm:$0xf]
  %v34 = vld [vmem:[%s0 + $0x4c] sm:$0xf]
  %v35 = vld [vmem:[%s0 + $0x50] sm:$0xf]
  %v36 = vld [vmem:[%s0 + $0x54] sm:$0xf]
  %v37 = vld [vmem:[%s0 + $0x58] sm:$0xf]
  %v38 = vld [vmem:[%s0 + $0x5c] sm:$0xf]
  %v39 = vld [vmem:[%s0 + $0x60] sm:$0xf]
  %v40 = vld [vmem:[%s0 + $0x64] sm:$0xf]
  %v41 = vld [vmem:[%s0 + $0x68] sm:$0xf]
  %v42 = vld [vmem:[%s0 + $0x6c] sm:$0xf]
  %v43 = vld [vmem:[%s0 + $0x70] sm:$0xf]
  %v44 = vld [vmem:[%s0 + $0x74] sm:$0xf]
  %v45 = vld [vmem:[%s0 + $0x78] sm:$0xf]
  %v46 = vld [vmem:[%s0 + $0x7c] sm:$0xf]
  %v47 = vld [vmem:[%s0 + $0x80] sm:$0xf]
  %v48 = vld [vmem:[%s0 + $0x84] sm:$0xf]
  %v49 = vld [vmem:[%s0 + $0x88] sm:$0xf]
  %v50 = vld [vmem:[%s0 + $0x8c] sm:$0xf]
  %v51 = vld [vmem:[%s0 + $0x90] sm:$0xf]
  %v52 = vld [vmem:[%s0 + $0x94] sm:$0xf]
  %v53 = vld [vmem:[%s0 + $0x98] sm:$0xf]
  %v54 = vld [vmem:[%s0 + $0x9c] sm:$0xf]
  %v55 = vld [vmem:[%s0 + $0xa0] sm:$0xf]
  %v56 = vld [vmem:[%s0 + $0xa4] sm:$0xf]
  %v57 = vld [vmem:[%s0 + $0xa8] sm:$0xf]
  %v58 = vld [vmem:[%s0 + $0xac] sm:$0xf]
  %v59 = vld [vmem:[%s0 + $0xb0] sm:$0xf]
  %v60 = vld [vmem:[%s0 + $0xb4] sm:$0xf]
  %v61 = vld [vmem:[%s0 + $0xb8] sm:$0xf]
  %v62 = vld [vmem:[%s0 + $0xbc] sm:$0xf]
  %v63 = vld [vmem:[%s0 + $0xc0] sm:$0xf]
  %v64 = vld [vmem:[%s0 + $0xc4] sm:$0xf]
  %v65 = vld [vmem:[%s1] sm:$0xf]
  %v66 = vld [vmem:[%s1 + $0x4] sm:$0xf]
  %v67 = vld [vmem:[%s2] sm:$0x1]
  %v69 = vperm.slane %v67, 0
  %v121 = vunpack.c.l.b16 %v15
  %v122 = vunpack.c.l.b16 %v16
  %v123 = vunpack.c.l.b16 %v17
  %v124 = vunpack.c.l.b16 %v18
  %v125 = vunpack.c.l.b16 %v19
  %v126 = vunpack.c.l.b16 %v20
  %v127 = vunpack.c.l.b16 %v21
  %v128 = vunpack.c.l.b16 %v22
  %v129 = vunpack.c.l.b16 %v23
  %v130 = vunpack.c.l.b16 %v24
  %v131 = vunpack.c.l.b16 %v25
  %v132 = vunpack.c.l.b16 %v26
  %v133 = vunpack.c.l.b16 %v27
  %v134 = vunpack.c.l.b16 %v28
  %v135 = vunpack.c.l.b16 %v29
  %v136 = vunpack.c.l.b16 %v30
  %v137 = vunpack.c.l.b16 %v31
  %v138 = vunpack.c.l.b16 %v32
  %v139 = vunpack.c.l.b16 %v33
  %v140 = vunpack.c.l.b16 %v34
  %v141 = vunpack.c.l.b16 %v35
  %v142 = vunpack.c.l.b16 %v36
  %v143 = vunpack.c.l.b16 %v37
  %v144 = vunpack.c.l.b16 %v38
  %v145 = vunpack.c.l.b16 %v39
  %v146 = vunpack.c.l.b16 %v40
  %v147 = vunpack.c.l.b16 %v41
  %v148 = vunpack.c.l.b16 %v42
  %v149 = vunpack.c.l.b16 %v43
  %v150 = vunpack.c.l.b16 %v44
  %v151 = vunpack.c.l.b16 %v45
  %v152 = vunpack.c.l.b16 %v46
  %v153 = vunpack.c.l.b16 %v47
  %v154 = vunpack.c.l.b16 %v48
  %v155 = vunpack.c.l.b16 %v49
  %v156 = vunpack.c.l.b16 %v50
  %v157 = vunpack.c.l.b16 %v51
  %v158 = vunpack.c.l.b16 %v52
  %v159 = vunpack.c.l.b16 %v53
  %v160 = vunpack.c.l.b16 %v54
  %v161 = vunpack.c.l.b16 %v55
  %v162 = vunpack.c.l.b16 %v56
  %v163 = vunpack.c.l.b16 %v57
  %v164 = vunpack.c.l.b16 %v58
  %v165 = vunpack.c.l.b16 %v59
  %v166 = vunpack.c.l.b16 %v60
  %v167 = vunpack.c.l.b16 %v61
  %v168 = vunpack.c.l.b16 %v62
  %v169 = vunpack.c.l.b16 %v63
  %v170 = vunpack.c.l.b16 %v64
  %v171 = vpack.c.b16 %v122, %v121
  %v172 = vpack.c.b16 %v124, %v123
  %v173 = vpack.c.b16 %v126, %v125
  %v174 = vpack.c.b16 %v128, %v127
  %v175 = vpack.c.b16 %v130, %v129
  %v176 = vpack.c.b16 %v132, %v131
  %v177 = vpack.c.b16 %v134, %v133
  %v178 = vpack.c.b16 %v136, %v135
  %v179 = vpack.c.b16 %v138, %v137
  %v180 = vpack.c.b16 %v140, %v139
  %v181 = vpack.c.b16 %v142, %v141
  %v182 = vpack.c.b16 %v144, %v143
  %v183 = vpack.c.b16 %v146, %v145
  %v184 = vpack.c.b16 %v148, %v147
  %v185 = vpack.c.b16 %v150, %v149
  %v186 = vpack.c.b16 %v152, %v151
  %v187 = vpack.c.b16 %v154, %v153
  %v188 = vpack.c.b16 %v156, %v155
  %v189 = vpack.c.b16 %v158, %v157
  %v190 = vpack.c.b16 %v160, %v159
  %v191 = vpack.c.b16 %v162, %v161
  %v192 = vpack.c.b16 %v164, %v163
  %v193 = vpack.c.b16 %v166, %v165
  %v194 = vpack.c.b16 %v168, %v167
  %v195 = vpack.c.b16 %v170, %v169
  %v198 = vunpack.c.l.b16 %v65
  %v199 = vunpack.c.l.b16 %v66
  %v200 = vpack.c.b16 %v199, %v198
  %vm202 = vcmask 130048
  %v204 = vsel %vm202, %v171, 0
  %v207 = vsel %vm202, %v172, 0
  %v210 = vsel %vm202, %v173, 0
  %v213 = vsel %vm202, %v174, 0
  %v216 = vsel %vm202, %v175, 0
  %v219 = vsel %vm202, %v176, 0
  %v222 = vsel %vm202, %v177, 0
  %v225 = vsel %vm202, %v178, 0
  %v228 = vsel %vm202, %v179, 0
  %v231 = vsel %vm202, %v180, 0
  %v234 = vsel %vm202, %v181, 0
  %v237 = vsel %vm202, %v182, 0
  %v240 = vsel %vm202, %v183, 0
  %v243 = vsel %vm202, %v184, 0
  %v246 = vsel %vm202, %v185, 0
  %v249 = vsel %vm202, %v186, 0
  %v252 = vsel %vm202, %v187, 0
  %v255 = vsel %vm202, %v188, 0
  %v258 = vsel %vm202, %v189, 0
  %v261 = vsel %vm202, %v190, 0
  %v264 = vsel %vm202, %v191, 0
  %v267 = vsel %vm202, %v192, 0
  %v270 = vsel %vm202, %v193, 0
  %v273 = vsel %vm202, %v194, 0
  %v276 = vsel %vm202, %v195, 0
  %278 = vmatpush.bf16.msra.mxu0 0
  %279 = vmatpush.bf16.msra.mxu0 0
  %280 = vmatpush.bf16.msra.mxu0 0
  %281 = vmatpush.bf16.msra.mxu0 0
  %282 = vmatpush.bf16.msra.mxu0 0
  %283 = vmatpush.bf16.msra.mxu0 0
  %284 = vmatpush.bf16.msra.mxu0 0
  %285 = vmatpush.bf16.msra.mxu0 %v200
  %286 = vmatmul.bf16.gmra.mxu0 %v204
  %v287 = vpop.f32.mrf.mxu0
  %v288 = vadd.f32 %v69, %v287
  %v289 = vpop.f32.mrf.mxu0
  %v290 = vadd.f32 %v69, %v289
  %291 = vmatmul.bf16.gmra.mxu0 %v207
  %v292 = vpop.f32.mrf.mxu0
  %v293 = vadd.f32 %v69, %v292
  %v294 = vpop.f32.mrf.mxu0
  %v295 = vadd.f32 %v69, %v294
  %296 = vmatmul.bf16.gmra.mxu0 %v210
  %v297 = vpop.f32.mrf.mxu0
  %v298 = vadd.f32 %v69, %v297
  %v299 = vpop.f32.mrf.mxu0
  %v300 = vadd.f32 %v69, %v299
  %301 = vmatmul.bf16.gmra.mxu0 %v213
  %v302 = vpop.f32.mrf.mxu0
  %v303 = vadd.f32 %v69, %v302
  %v304 = vpop.f32.mrf.mxu0
  %v305 = vadd.f32 %v69, %v304
  %306 = vmatmul.bf16.gmra.mxu0 %v216
  %v307 = vpop.f32.mrf.mxu0
  %v308 = vadd.f32 %v69, %v307
  %v309 = vpop.f32.mrf.mxu0
  %v310 = vadd.f32 %v69, %v309
  %311 = vmatmul.bf16.gmra.mxu0 %v219
  %v312 = vpop.f32.mrf.mxu0
  %v313 = vadd.f32 %v69, %v312
  %v314 = vpop.f32.mrf.mxu0
  %v315 = vadd.f32 %v69, %v314
  %316 = vmatmul.bf16.gmra.mxu0 %v222
  %v317 = vpop.f32.mrf.mxu0
  %v318 = vadd.f32 %v69, %v317
  %v319 = vpop.f32.mrf.mxu0
  %v320 = vadd.f32 %v69, %v319
  %321 = vmatmul.bf16.gmra.mxu0 %v225
  %v322 = vpop.f32.mrf.mxu0
  %v323 = vadd.f32 %v69, %v322
  %v324 = vpop.f32.mrf.mxu0
  %v325 = vadd.f32 %v69, %v324
  %326 = vmatmul.bf16.gmra.mxu0 %v228
  %v327 = vpop.f32.mrf.mxu0
  %v328 = vadd.f32 %v69, %v327
  %v329 = vpop.f32.mrf.mxu0
  %v330 = vadd.f32 %v69, %v329
  %331 = vmatmul.bf16.gmra.mxu0 %v231
  %v332 = vpop.f32.mrf.mxu0
  %v333 = vadd.f32 %v69, %v332
  %v334 = vpop.f32.mrf.mxu0
  %v335 = vadd.f32 %v69, %v334
  %336 = vmatmul.bf16.gmra.mxu0 %v234
  %v337 = vpop.f32.mrf.mxu0
  %v338 = vadd.f32 %v69, %v337
  %v339 = vpop.f32.mrf.mxu0
  %v340 = vadd.f32 %v69, %v339
  %341 = vmatmul.bf16.gmra.mxu0 %v237
  %v342 = vpop.f32.mrf.mxu0
  %v343 = vadd.f32 %v69, %v342
  %v344 = vpop.f32.mrf.mxu0
  %v345 = vadd.f32 %v69, %v344
  %346 = vmatmul.bf16.gmra.mxu0 %v240
  %v347 = vpop.f32.mrf.mxu0
  %v348 = vadd.f32 %v69, %v347
  %v349 = vpop.f32.mrf.mxu0
  %v350 = vadd.f32 %v69, %v349
  %351 = vmatmul.bf16.gmra.mxu0 %v243
  %v352 = vpop.f32.mrf.mxu0
  %v353 = vadd.f32 %v69, %v352
  %v354 = vpop.f32.mrf.mxu0
  %v355 = vadd.f32 %v69, %v354
  %356 = vmatmul.bf16.gmra.mxu0 %v246
  %v357 = vpop.f32.mrf.mxu0
  %v358 = vadd.f32 %v69, %v357
  %v359 = vpop.f32.mrf.mxu0
  %v360 = vadd.f32 %v69, %v359
  %361 = vmatmul.bf16.gmra.mxu0 %v249
  %v362 = vpop.f32.mrf.mxu0
  %v363 = vadd.f32 %v69, %v362
  %v364 = vpop.f32.mrf.mxu0
  %v365 = vadd.f32 %v69, %v364
  %366 = vmatmul.bf16.gmra.mxu0 %v252
  %v367 = vpop.f32.mrf.mxu0
  %v368 = vadd.f32 %v69, %v367
  %v369 = vpop.f32.mrf.mxu0
  %v370 = vadd.f32 %v69, %v369
  %371 = vmatmul.bf16.gmra.mxu0 %v255
  %v372 = vpop.f32.mrf.mxu0
  %v373 = vadd.f32 %v69, %v372
  %v374 = vpop.f32.mrf.mxu0
  %v375 = vadd.f32 %v69, %v374
  %376 = vmatmul.bf16.gmra.mxu0 %v258
  %v377 = vpop.f32.mrf.mxu0
  %v378 = vadd.f32 %v69, %v377
  %v379 = vpop.f32.mrf.mxu0
  %v380 = vadd.f32 %v69, %v379
  %381 = vmatmul.bf16.gmra.mxu0 %v261
  %v382 = vpop.f32.mrf.mxu0
  %v383 = vadd.f32 %v69, %v382
  %v384 = vpop.f32.mrf.mxu0
  %v385 = vadd.f32 %v69, %v384
  %386 = vmatmul.bf16.gmra.mxu0 %v264
  %v387 = vpop.f32.mrf.mxu0
  %v388 = vadd.f32 %v69, %v387
  %v389 = vpop.f32.mrf.mxu0
  %v390 = vadd.f32 %v69, %v389
  %391 = vmatmul.bf16.gmra.mxu0 %v267
  %v392 = vpop.f32.mrf.mxu0
  %v393 = vadd.f32 %v69, %v392
  %v394 = vpop.f32.mrf.mxu0
  %v395 = vadd.f32 %v69, %v394
  %396 = vmatmul.bf16.gmra.mxu0 %v270
  %v397 = vpop.f32.mrf.mxu0
  %v398 = vadd.f32 %v69, %v397
  %v399 = vpop.f32.mrf.mxu0
  %v400 = vadd.f32 %v69, %v399
  %401 = vmatmul.bf16.gmra.mxu0 %v273
  %v402 = vpop.f32.mrf.mxu0
  %v403 = vadd.f32 %v69, %v402
  %v404 = vpop.f32.mrf.mxu0
  %v405 = vadd.f32 %v69, %v404
  %406 = vmatmul.bf16.gmra.mxu0 %v276
  %v407 = vpop.f32.mrf.mxu0
  %v408 = vadd.f32 %v69, %v407
  %v409 = vpop.f32.mrf.mxu0
  %v410 = vadd.f32 %v69, %v409
  %411 = vdwg.mxu0
  %v412 = vmax.f32 %v288, 0.0
  %v413 = vmax.f32 %v290, 0.0
  %v414 = vmax.f32 %v293, 0.0
  %v415 = vmax.f32 %v295, 0.0
  %v416 = vmax.f32 %v298, 0.0
  %v417 = vmax.f32 %v300, 0.0
  %v418 = vmax.f32 %v303, 0.0
  %v419 = vmax.f32 %v305, 0.0
  %v420 = vmax.f32 %v308, 0.0
  %v421 = vmax.f32 %v310, 0.0
  %v422 = vmax.f32 %v313, 0.0
  %v423 = vmax.f32 %v315, 0.0
  %v424 = vmax.f32 %v318, 0.0
  %v425 = vmax.f32 %v320, 0.0
  %v426 = vmax.f32 %v323, 0.0
  %v427 = vmax.f32 %v325, 0.0
  %v428 = vmax.f32 %v328, 0.0
  %v429 = vmax.f32 %v330, 0.0
  %v430 = vmax.f32 %v333, 0.0
  %v431 = vmax.f32 %v335, 0.0
  %v432 = vmax.f32 %v338, 0.0
  %v433 = vmax.f32 %v340, 0.0
  %v434 = vmax.f32 %v343, 0.0
  %v435 = vmax.f32 %v345, 0.0
  %v436 = vmax.f32 %v348, 0.0
  %v437 = vmax.f32 %v350, 0.0
  %v438 = vmax.f32 %v353, 0.0
  %v439 = vmax.f32 %v355, 0.0
  %v440 = vmax.f32 %v358, 0.0
  %v441 = vmax.f32 %v360, 0.0
  %v442 = vmax.f32 %v363, 0.0
  %v443 = vmax.f32 %v365, 0.0
  %v444 = vmax.f32 %v368, 0.0
  %v445 = vmax.f32 %v370, 0.0
  %v446 = vmax.f32 %v373, 0.0
  %v447 = vmax.f32 %v375, 0.0
  %v448 = vmax.f32 %v378, 0.0
  %v449 = vmax.f32 %v380, 0.0
  %v450 = vmax.f32 %v383, 0.0
  %v451 = vmax.f32 %v385, 0.0
  %v452 = vmax.f32 %v388, 0.0
  %v453 = vmax.f32 %v390, 0.0
  %v454 = vmax.f32 %v393, 0.0
  %v455 = vmax.f32 %v395, 0.0
  %v456 = vmax.f32 %v398, 0.0
  %v457 = vmax.f32 %v400, 0.0
  %v458 = vmax.f32 %v403, 0.0
  %v459 = vmax.f32 %v405, 0.0
  %v460 = vmax.f32 %v408, 0.0
  %v461 = vmax.f32 %v410, 0.0
  %v462 = vpack.c.bf16 %v412, %v412
  %v463 = vpack.c.bf16 %v413, %v413
  %v464 = vpack.c.bf16 %v414, %v414
  %v465 = vpack.c.bf16 %v415, %v415
  %v466 = vpack.c.bf16 %v416, %v416
  %v467 = vpack.c.bf16 %v417, %v417
  %v468 = vpack.c.bf16 %v418, %v418
  %v469 = vpack.c.bf16 %v419, %v419
  %v470 = vpack.c.bf16 %v420, %v420
  %v471 = vpack.c.bf16 %v421, %v421
  %v472 = vpack.c.bf16 %v422, %v422
  %v473 = vpack.c.bf16 %v423, %v423
  %v474 = vpack.c.bf16 %v424, %v424
  %v475 = vpack.c.bf16 %v425, %v425
  %v476 = vpack.c.bf16 %v426, %v426
  %v477 = vpack.c.bf16 %v427, %v427
  %v478 = vpack.c.bf16 %v428, %v428
  %v479 = vpack.c.bf16 %v429, %v429
  %v480 = vpack.c.bf16 %v430, %v430
  %v481 = vpack.c.bf16 %v431, %v431
  %v482 = vpack.c.bf16 %v432, %v432
  %v483 = vpack.c.bf16 %v433, %v433
  %v484 = vpack.c.bf16 %v434, %v434
  %v485 = vpack.c.bf16 %v435, %v435
  %v486 = vpack.c.bf16 %v436, %v436
  %v487 = vpack.c.bf16 %v437, %v437
  %v488 = vpack.c.bf16 %v438, %v438
  %v489 = vpack.c.bf16 %v439, %v439
  %v490 = vpack.c.bf16 %v440, %v440
  %v491 = vpack.c.bf16 %v441, %v441
  %v492 = vpack.c.bf16 %v442, %v442
  %v493 = vpack.c.bf16 %v443, %v443
  %v494 = vpack.c.bf16 %v444, %v444
  %v495 = vpack.c.bf16 %v445, %v445
  %v496 = vpack.c.bf16 %v446, %v446
  %v497 = vpack.c.bf16 %v447, %v447
  %v498 = vpack.c.bf16 %v448, %v448
  %v499 = vpack.c.bf16 %v449, %v449
  %v500 = vpack.c.bf16 %v450, %v450
  %v501 = vpack.c.bf16 %v451, %v451
  %v502 = vpack.c.bf16 %v452, %v452
  %v503 = vpack.c.bf16 %v453, %v453
  %v504 = vpack.c.bf16 %v454, %v454
  %v505 = vpack.c.bf16 %v455, %v455
  %v506 = vpack.c.bf16 %v456, %v456
  %v507 = vpack.c.bf16 %v457, %v457
  %v508 = vpack.c.bf16 %v458, %v458
  %v509 = vpack.c.bf16 %v459, %v459
  %v510 = vpack.c.bf16 %v460, %v460
  %v511 = vpack.c.bf16 %v461, %v461
  %512 = vst [vmem:[%s3] sm:$0xf] %v462
  %513 = vst [vmem:[%s3 + $0x4] sm:$0xf] %v463
  %514 = vst [vmem:[%s3 + $0x8] sm:$0xf] %v464
  %515 = vst [vmem:[%s3 + $0xc] sm:$0xf] %v465
  %516 = vst [vmem:[%s3 + $0x10] sm:$0xf] %v466
  %517 = vst [vmem:[%s3 + $0x14] sm:$0xf] %v467
  %518 = vst [vmem:[%s3 + $0x18] sm:$0xf] %v468
  %519 = vst [vmem:[%s3 + $0x1c] sm:$0xf] %v469
  %520 = vst [vmem:[%s3 + $0x20] sm:$0xf] %v470
  %521 = vst [vmem:[%s3 + $0x24] sm:$0xf] %v471
  %522 = vst [vmem:[%s3 + $0x28] sm:$0xf] %v472
  %523 = vst [vmem:[%s3 + $0x2c] sm:$0xf] %v473
  %524 = vst [vmem:[%s3 + $0x30] sm:$0xf] %v474
  %525 = vst [vmem:[%s3 + $0x34] sm:$0xf] %v475
  %526 = vst [vmem:[%s3 + $0x38] sm:$0xf] %v476
  %527 = vst [vmem:[%s3 + $0x3c] sm:$0xf] %v477
  %528 = vst [vmem:[%s3 + $0x40] sm:$0xf] %v478
  %529 = vst [vmem:[%s3 + $0x44] sm:$0xf] %v479
  %530 = vst [vmem:[%s3 + $0x48] sm:$0xf] %v480
  %531 = vst [vmem:[%s3 + $0x4c] sm:$0xf] %v481
  %532 = vst [vmem:[%s3 + $0x50] sm:$0xf] %v482
  %533 = vst [vmem:[%s3 + $0x54] sm:$0xf] %v483
  %534 = vst [vmem:[%s3 + $0x58] sm:$0xf] %v484
  %535 = vst [vmem:[%s3 + $0x5c] sm:$0xf] %v485
  %536 = vst [vmem:[%s3 + $0x60] sm:$0xf] %v486
  %537 = vst [vmem:[%s3 + $0x64] sm:$0xf] %v487
  %538 = vst [vmem:[%s3 + $0x68] sm:$0xf] %v488
  %539 = vst [vmem:[%s3 + $0x6c] sm:$0xf] %v489
  %540 = vst [vmem:[%s3 + $0x70] sm:$0xf] %v490
  %541 = vst [vmem:[%s3 + $0x74] sm:$0xf] %v491
  %542 = vst [vmem:[%s3 + $0x78] sm:$0xf] %v492
  %543 = vst [vmem:[%s3 + $0x7c] sm:$0xf] %v493
  %544 = vst [vmem:[%s3 + $0x80] sm:$0xf] %v494
  %545 = vst [vmem:[%s3 + $0x84] sm:$0xf] %v495
  %546 = vst [vmem:[%s3 + $0x88] sm:$0xf] %v496
  %547 = vst [vmem:[%s3 + $0x8c] sm:$0xf] %v497
  %548 = vst [vmem:[%s3 + $0x90] sm:$0xf] %v498
  %549 = vst [vmem:[%s3 + $0x94] sm:$0xf] %v499
  %550 = vst [vmem:[%s3 + $0x98] sm:$0xf] %v500
  %551 = vst [vmem:[%s3 + $0x9c] sm:$0xf] %v501
  %552 = vst [vmem:[%s3 + $0xa0] sm:$0xf] %v502
  %553 = vst [vmem:[%s3 + $0xa4] sm:$0xf] %v503
  %554 = vst [vmem:[%s3 + $0xa8] sm:$0xf] %v504
  %555 = vst [vmem:[%s3 + $0xac] sm:$0xf] %v505
  %556 = vst [vmem:[%s3 + $0xb0] sm:$0xf] %v506
  %557 = vst [vmem:[%s3 + $0xb4] sm:$0xf] %v507
  %558 = vst [vmem:[%s3 + $0xb8] sm:$0xf] %v508
  %559 = vst [vmem:[%s3 + $0xbc] sm:$0xf] %v509
  %560 = vst [vmem:[%s3 + $0xc0] sm:$0xf] %v510
  %561 = vst [vmem:[%s3 + $0xc4] sm:$0xf] %v511
  // Predicated region
  $region14: #{bayes_model_forward.6} parent=0 // pred_check
    _
  $region15: #{bayes_model_forward.6} parent=0 // pred_check_branch
    %563 = sbr.rel (0) target = $region17
  $region16: #{bayes_model_forward.6} parent=0 // pred_region
    _
  $region17: #{bayes_model_forward.6} parent=0 // pred_fallthru
    _
  // Predicated region
  $region18: #{bayes_model_forward.6} parent=0 // pred_check
    _
  $region19: #{bayes_model_forward.6} parent=0 // pred_check_branch
    %565 = sbr.rel (0) target = $region21
  $region20: #{bayes_model_forward.6} parent=0 // pred_region
    _
  $region21: #{bayes_model_forward.6} parent=0 // pred_fallthru
    _

// kernel: bayes_model_forward.7
$region0: #{bayes_model_forward.7}
  #allocation0 [shape = 'u32[]', space=smem, size = 0x4, offset = 0x4, fixed_abs, tag = 'smem constant byte address 0x4 - core index']
  #allocation1 [shape = 'u32[72,128]{1,0:T(1,128)}', space=vmem, size = 0x9000, scoped, tag = 'internal scratch']
  %s0 = inlined_call_operand.vmem [shape: bf16[112,128], index: 0, kind: input, shape index: {}]
  %s1 = inlined_call_operand.vmem [shape: bf16[128,128], index: 1, kind: input, shape index: {}]
  %s2 = inlined_call_operand.vmem [shape: f32[1,128], index: 2, kind: input, shape index: {}]
  %s3 = inlined_call_operand.vmem [shape: bf16[112,128], index: 3, kind: output, shape index: {}]
  %s4 = sld [smem:[#allocation0]]
  $region22: #{bayes_model_forward.7} parent=0
    _
  %s6 = ssub.s32 1, %s4
  %s7 = scalar_select 0, %s6, %s4
  // Predicated region
  $region2: #{bayes_model_forward.7} parent=0 // pred_check
    _
  $region3: #{bayes_model_forward.7} parent=0 // pred_check_branch
    %9 = sbr.rel (0) target = $region5
  $region4: #{bayes_model_forward.7} parent=0 // pred_region
    _
  $region5: #{bayes_model_forward.7} parent=0 // pred_fallthru
    _
  // Predicated region
  $region6: #{bayes_model_forward.7} parent=0 // pred_check
    _
  $region7: #{bayes_model_forward.7} parent=0 // pred_check_branch
    %11 = sbr.rel (0) target = $region9
  $region8: #{bayes_model_forward.7} parent=0 // pred_region
    _
  $region9: #{bayes_model_forward.7} parent=0 // pred_fallthru
    _
  // Predicated region
  $region10: #{bayes_model_forward.7} parent=0 // pred_check
    _
  $region11: #{bayes_model_forward.7} parent=0 // pred_check_branch
    %13 = sbr.rel (0) target = $region13
  $region12: #{bayes_model_forward.7} parent=0 // pred_region
    _
  $region13: #{bayes_model_forward.7} parent=0 // pred_fallthru
    _
  %v14 = vld [vmem:[%s0] sm:$0xf]
  %v15 = vld [vmem:[%s0 + $0x4] sm:$0xf]
  %v16 = vld [vmem:[%s0 + $0x8] sm:$0xf]
  %v17 = vld [vmem:[%s0 + $0xc] sm:$0xf]
  %v18 = vld [vmem:[%s0 + $0x10] sm:$0xf]
  %v19 = vld [vmem:[%s0 + $0x14] sm:$0xf]
  %v20 = vld [vmem:[%s0 + $0x18] sm:$0xf]
  %v21 = vld [vmem:[%s0 + $0x1c] sm:$0xf]
  %v22 = vld [vmem:[%s0 + $0x20] sm:$0xf]
  %v23 = vld [vmem:[%s0 + $0x24] sm:$0xf]
  %v24 = vld [vmem:[%s0 + $0x28] sm:$0xf]
  %v25 = vld [vmem:[%s0 + $0x2c] sm:$0xf]
  %v26 = vld [vmem:[%s0 + $0x30] sm:$0xf]
  %v27 = vld [vmem:[%s0 + $0x34] sm:$0xf]
  %v28 = vld [vmem:[%s1] sm:$0xf]
  %v29 = vld [vmem:[%s1 + $0x4] sm:$0xf]
  %v30 = vld [vmem:[%s1 + $0x8] sm:$0xf]
  %v31 = vld [vmem:[%s1 + $0xc] sm:$0xf]
  %v32 = vld [vmem:[%s1 + $0x10] sm:$0xf]
  %v33 = vld [vmem:[%s1 + $0x14] sm:$0xf]
  %v34 = vld [vmem:[%s1 + $0x18] sm:$0xf]
  %v35 = vld [vmem:[%s1 + $0x1c] sm:$0xf]
  %v36 = vld [vmem:[%s1 + $0x20] sm:$0xf]
  %v37 = vld [vmem:[%s1 + $0x24] sm:$0xf]
  %v38 = vld [vmem:[%s1 + $0x28] sm:$0xf]
  %v39 = vld [vmem:[%s1 + $0x2c] sm:$0xf]
  %v40 = vld [vmem:[%s1 + $0x30] sm:$0xf]
  %v41 = vld [vmem:[%s1 + $0x34] sm:$0xf]
  %v42 = vld [vmem:[%s1 + $0x38] sm:$0xf]
  %v43 = vld [vmem:[%s1 + $0x3c] sm:$0xf]
  %v44 = vld [vmem:[%s2] sm:$0x1]
  %v46 = vperm.slane %v44, 0
  %v62 = vunpack.c.l.b16 %v14
  %v63 = vunpack.c.l.b16 %v15
  %v64 = vunpack.c.l.b16 %v16
  %v65 = vunpack.c.l.b16 %v17
  %v66 = vunpack.c.l.b16 %v18
  %v67 = vunpack.c.l.b16 %v19
  %v68 = vunpack.c.l.b16 %v20
  %v69 = vunpack.c.l.b16 %v21
  %v70 = vunpack.c.l.b16 %v22
  %v71 = vunpack.c.l.b16 %v23
  %v72 = vunpack.c.l.b16 %v24
  %v73 = vunpack.c.l.b16 %v25
  %v74 = vunpack.c.l.b16 %v26
  %v75 = vunpack.c.l.b16 %v27
  %v76 = vpack.c.b16 %v63, %v62
  %v77 = vpack.c.b16 %v65, %v64
  %v78 = vpack.c.b16 %v67, %v66
  %v79 = vpack.c.b16 %v69, %v68
  %v80 = vpack.c.b16 %v71, %v70
  %v81 = vpack.c.b16 %v73, %v72
  %v82 = vpack.c.b16 %v75, %v74
  %v106 = vunpack.c.l.b16 %v28
  %v107 = vunpack.c.l.b16 %v29
  %v108 = vunpack.c.l.b16 %v30
  %v109 = vunpack.c.l.b16 %v31
  %v110 = vunpack.c.l.b16 %v32
  %v111 = vunpack.c.l.b16 %v33
  %v112 = vunpack.c.l.b16 %v34
  %v113 = vunpack.c.l.b16 %v35
  %v114 = vunpack.c.l.b16 %v36
  %v115 = vunpack.c.l.b16 %v37
  %v116 = vunpack.c.l.b16 %v38
  %v117 = vunpack.c.l.b16 %v39
  %v118 = vunpack.c.l.b16 %v40
  %v119 = vunpack.c.l.b16 %v41
  %v120 = vunpack.c.l.b16 %v42
  %v121 = vunpack.c.l.b16 %v43
  %v122 = vpack.c.b16 %v107, %v106
  %v123 = vpack.c.b16 %v109, %v108
  %v124 = vpack.c.b16 %v111, %v110
  %v125 = vpack.c.b16 %v113, %v112
  %v126 = vpack.c.b16 %v115, %v114
  %v127 = vpack.c.b16 %v117, %v116
  %v128 = vpack.c.b16 %v119, %v118
  %v129 = vpack.c.b16 %v121, %v120
  %138 = vmatpush.bf16.msra.mxu0 %v129
  %139 = vmatpush.bf16.msra.mxu0 %v128
  %140 = vmatpush.bf16.msra.mxu0 %v127
  %141 = vmatpush.bf16.msra.mxu0 %v126
  %142 = vmatpush.bf16.msra.mxu0 %v125
  %143 = vmatpush.bf16.msra.mxu0 %v124
  %144 = vmatpush.bf16.msra.mxu0 %v123
  %145 = vmatpush.bf16.msra.mxu0 %v122
  %146 = vmatmul.bf16.gmra.mxu0 %v76
  %v147 = vpop.f32.mrf.mxu0
  %v148 = vadd.f32 %v46, %v147
  %v149 = vpop.f32.mrf.mxu0
  %v150 = vadd.f32 %v46, %v149
  %151 = vmatmul.bf16.gmra.mxu0 %v77
  %v152 = vpop.f32.mrf.mxu0
  %v153 = vadd.f32 %v46, %v152
  %v154 = vpop.f32.mrf.mxu0
  %v155 = vadd.f32 %v46, %v154
  %156 = vmatmul.bf16.gmra.mxu0 %v78
  %v157 = vpop.f32.mrf.mxu0
  %v158 = vadd.f32 %v46, %v157
  %v159 = vpop.f32.mrf.mxu0
  %v160 = vadd.f32 %v46, %v159
  %161 = vmatmul.bf16.gmra.mxu0 %v79
  %v162 = vpop.f32.mrf.mxu0
  %v163 = vadd.f32 %v46, %v162
  %v164 = vpop.f32.mrf.mxu0
  %v165 = vadd.f32 %v46, %v164
  %166 = vmatmul.bf16.gmra.mxu0 %v80
  %v167 = vpop.f32.mrf.mxu0
  %v168 = vadd.f32 %v46, %v167
  %v169 = vpop.f32.mrf.mxu0
  %v170 = vadd.f32 %v46, %v169
  %171 = vmatmul.bf16.gmra.mxu0 %v81
  %v172 = vpop.f32.mrf.mxu0
  %v173 = vadd.f32 %v46, %v172
  %v174 = vpop.f32.mrf.mxu0
  %v175 = vadd.f32 %v46, %v174
  %176 = vmatmul.bf16.gmra.mxu0 %v82
  %v177 = vpop.f32.mrf.mxu0
  %v178 = vadd.f32 %v46, %v177
  %v179 = vpop.f32.mrf.mxu0
  %v180 = vadd.f32 %v46, %v179
  %181 = vdwg.mxu0
  %v182 = vmax.f32 %v148, 0.0
  %v183 = vmax.f32 %v150, 0.0
  %v184 = vmax.f32 %v153, 0.0
  %v185 = vmax.f32 %v155, 0.0
  %v186 = vmax.f32 %v158, 0.0
  %v187 = vmax.f32 %v160, 0.0
  %v188 = vmax.f32 %v163, 0.0
  %v189 = vmax.f32 %v165, 0.0
  %v190 = vmax.f32 %v168, 0.0
  %v191 = vmax.f32 %v170, 0.0
  %v192 = vmax.f32 %v173, 0.0
  %v193 = vmax.f32 %v175, 0.0
  %v194 = vmax.f32 %v178, 0.0
  %v195 = vmax.f32 %v180, 0.0
  %v196 = vpack.c.bf16 %v182, %v182
  %v197 = vpack.c.bf16 %v183, %v183
  %v198 = vpack.c.bf16 %v184, %v184
  %v199 = vpack.c.bf16 %v185, %v185
  %v200 = vpack.c.bf16 %v186, %v186
  %v201 = vpack.c.bf16 %v187, %v187
  %v202 = vpack.c.bf16 %v188, %v188
  %v203 = vpack.c.bf16 %v189, %v189
  %v204 = vpack.c.bf16 %v190, %v190
  %v205 = vpack.c.bf16 %v191, %v191
  %v206 = vpack.c.bf16 %v192, %v192
  %v207 = vpack.c.bf16 %v193, %v193
  %v208 = vpack.c.bf16 %v194, %v194
  %v209 = vpack.c.bf16 %v195, %v195
  %210 = vst [vmem:[%s3] sm:$0xf] %v196
  %211 = vst [vmem:[%s3 + $0x4] sm:$0xf] %v197
  %212 = vst [vmem:[%s3 + $0x8] sm:$0xf] %v198
  %213 = vst [vmem:[%s3 + $0xc] sm:$0xf] %v199
  %214 = vst [vmem:[%s3 + $0x10] sm:$0xf] %v200
  %215 = vst [vmem:[%s3 + $0x14] sm:$0xf] %v201
  %216 = vst [vmem:[%s3 + $0x18] sm:$0xf] %v202
  %217 = vst [vmem:[%s3 + $0x1c] sm:$0xf] %v203
  %218 = vst [vmem:[%s3 + $0x20] sm:$0xf] %v204
  %219 = vst [vmem:[%s3 + $0x24] sm:$0xf] %v205
  %220 = vst [vmem:[%s3 + $0x28] sm:$0xf] %v206
  %221 = vst [vmem:[%s3 + $0x2c] sm:$0xf] %v207
  %222 = vst [vmem:[%s3 + $0x30] sm:$0xf] %v208
  %223 = vst [vmem:[%s3 + $0x34] sm:$0xf] %v209
  // Predicated region
  $region14: #{bayes_model_forward.7} parent=0 // pred_check
    _
  $region15: #{bayes_model_forward.7} parent=0 // pred_check_branch
    %225 = sbr.rel (0) target = $region17
  $region16: #{bayes_model_forward.7} parent=0 // pred_region
    _
  $region17: #{bayes_model_forward.7} parent=0 // pred_fallthru
    _
  // Predicated region
  $region18: #{bayes_model_forward.7} parent=0 // pred_check
    _
  $region19: #{bayes_model_forward.7} parent=0 // pred_check_branch
    %227 = sbr.rel (0) target = $region21
  $region20: #{bayes_model_forward.7} parent=0 // pred_region
    _
  $region21: #{bayes_model_forward.7} parent=0 // pred_fallthru
    _

// kernel: bayes_model_forward.9
$region0: #{bayes_model_forward.9}
  #allocation0 [shape = 'u32[]', space=smem, size = 0x4, offset = 0x4, fixed_abs, tag = 'smem constant byte address 0x4 - core index']
  #allocation1 [shape = 'u32[72,128]{1,0:T(1,128)}', space=vmem, size = 0x9000, scoped, tag = 'internal scratch']
  %s0 = inlined_call_operand.vmem [shape: bf16[16,32], index: 0, kind: input, shape index: {}]
  %s1 = inlined_call_operand.vmem [shape: bf16[32,896], index: 1, kind: input, shape index: {}]
  %s2 = inlined_call_operand.vmem [shape: f32[1,896], index: 2, kind: input, shape index: {}]
  %s3 = inlined_call_operand.vmem [shape: f32[1,896], index: 3, kind: input, shape index: {}]
  %s4 = inlined_call_operand.vmem [shape: bf16[16,896], index: 4, kind: output, shape index: {}]
  %s5 = sld [smem:[#allocation0]]
  $region26: #{bayes_model_forward.9} parent=0
    _
  %s7 = ssub.s32 1, %s5
  %s8 = scalar_select 0, %s7, %s5
  // Predicated region
  $region2: #{bayes_model_forward.9} parent=0 // pred_check
    _
  $region3: #{bayes_model_forward.9} parent=0 // pred_check_branch
    %10 = sbr.rel (0) target = $region5
  $region4: #{bayes_model_forward.9} parent=0 // pred_region
    _
  $region5: #{bayes_model_forward.9} parent=0 // pred_fallthru
    _
  // Predicated region
  $region6: #{bayes_model_forward.9} parent=0 // pred_check
    _
  $region7: #{bayes_model_forward.9} parent=0 // pred_check_branch
    %12 = sbr.rel (0) target = $region9
  $region8: #{bayes_model_forward.9} parent=0 // pred_region
    _
  $region9: #{bayes_model_forward.9} parent=0 // pred_fallthru
    _
  // Predicated region
  $region10: #{bayes_model_forward.9} parent=0 // pred_check
    _
  $region11: #{bayes_model_forward.9} parent=0 // pred_check_branch
    %14 = sbr.rel (0) target = $region13
  $region12: #{bayes_model_forward.9} parent=0 // pred_region
    _
  $region13: #{bayes_model_forward.9} parent=0 // pred_fallthru
    _
  // Predicated region
  $region14: #{bayes_model_forward.9} parent=0 // pred_check
    _
  $region15: #{bayes_model_forward.9} parent=0 // pred_check_branch
    %16 = sbr.rel (0) target = $region17
  $region16: #{bayes_model_forward.9} parent=0 // pred_region
    _
  $region17: #{bayes_model_forward.9} parent=0 // pred_fallthru
    _
  %v18 = vld [vmem:[%s0] sm:$0xf]
  %v19 = vld [vmem:[%s0 + $0x4] sm:$0xf]
  %v20 = vld [vmem:[%s1] sm:$0xff]
  %v21 = vld [vmem:[%s1 + $0x8] sm:$0xff]
  %v22 = vld [vmem:[%s1 + $0x10] sm:$0xff]
  %v23 = vld [vmem:[%s1 + $0x18] sm:$0xf]
  %v24 = vld [vmem:[%s1 + $0x1c] sm:$0xff]
  %v25 = vld [vmem:[%s1 + $0x24] sm:$0xff]
  %v26 = vld [vmem:[%s1 + $0x2c] sm:$0xff]
  %v27 = vld [vmem:[%s1 + $0x34] sm:$0xf]
  %v28 = vld [vmem:[%s1 + $0x38] sm:$0xff]
  %v29 = vld [vmem:[%s1 + $0x40] sm:$0xff]
  %v30 = vld [vmem:[%s1 + $0x48] sm:$0xff]
  %v31 = vld [vmem:[%s1 + $0x50] sm:$0xf]
  %v32 = vld [vmem:[%s1 + $0x54] sm:$0xff]
  %v33 = vld [vmem:[%s1 + $0x5c] sm:$0xff]
  %v34 = vld [vmem:[%s1 + $0x64] sm:$0xff]
  %v35 = vld [vmem:[%s1 + $0x6c] sm:$0xf]
  %v36 = vld [vmem:[%s2] sm:$0xff]
  %v38 = vperm.slane %v36, 0
  %v39 = vperm.slane %v36, 1
  %v40 = vperm.slane %v36, 2
  %v41 = vperm.slane %v36, 3
  %v42 = vperm.slane %v36, 4
  %v43 = vperm.slane %v36, 5
  %v44 = vperm.slane %v36, 6
  %v54 = vunpack.c.l.b16 %v18
  %v55 = vunpack.c.l.b16 %v19
  %v56 = vpack.c.b16 %v55, %v54
  %v73 = vunpack.c.l.b16 %v20
  %v74 = vunpack.c.h.b16 %v20
  %v75 = vunpack.c.l.b16 %v21
  %v76 = vunpack.c.h.b16 %v21
  %v77 = vunpack.c.l.b16 %v22
  %v78 = vunpack.c.h.b16 %v22
  %v79 = vunpack.c.l.b16 %v23
  %v80 = vunpack.c.l.b16 %v24
  %v81 = vunpack.c.h.b16 %v24
  %v82 = vunpack.c.l.b16 %v25
  %v83 = vunpack.c.h.b16 %v25
  %v84 = vunpack.c.l.b16 %v26
  %v85 = vunpack.c.h.b16 %v26
  %v86 = vunpack.c.l.b16 %v27
  %v87 = vunpack.c.l.b16 %v28
  %v88 = vunpack.c.h.b16 %v28
  %v89 = vunpack.c.l.b16 %v29
  %v90 = vunpack.c.h.b16 %v29
  %v91 = vunpack.c.l.b16 %v30
  %v92 = vunpack.c.h.b16 %v30
  %v93 = vunpack.c.l.b16 %v31
  %v94 = vunpack.c.l.b16 %v32
  %v95 = vunpack.c.h.b16 %v32
  %v96 = vunpack.c.l.b16 %v33
  %v97 = vunpack.c.h.b16 %v33
  %v98 = vunpack.c.l.b16 %v34
  %v99 = vunpack.c.h.b16 %v34
  %v100 = vunpack.c.l.b16 %v35
  %v101 = vpack.c.b16 %v80, %v73
  %v102 = vpack.c.b16 %v81, %v74
  %v103 = vpack.c.b16 %v82, %v75
  %v104 = vpack.c.b16 %v83, %v76
  %v105 = vpack.c.b16 %v84, %v77
  %v106 = vpack.c.b16 %v85, %v78
  %v107 = vpack.c.b16 %v86, %v79
  %v108 = vpack.c.b16 %v94, %v87
  %v109 = vpack.c.b16 %v95, %v88
  %v110 = vpack.c.b16 %v96, %v89
  %v111 = vpack.c.b16 %v97, %v90
  %v112 = vpack.c.b16 %v98, %v91
  %v113 = vpack.c.b16 %v99, %v92
  %v114 = vpack.c.b16 %v100, %v93
  %vm129 = vcmask 261120
  %v131 = vsel %vm129, %v56, 0
  %133 = vmatpush.bf16.msra.mxu0 0
  %134 = vmatpush.bf16.msra.mxu0 0
  %135 = vmatpush.bf16.msra.mxu0 0
  %136 = vmatpush.bf16.msra.mxu0 0
  %137 = vmatpush.bf16.msra.mxu0 0
  %138 = vmatpush.bf16.msra.mxu0 0
  %139 = vmatpush.bf16.msra.mxu0 %v108
  %140 = vmatpush.bf16.msra.mxu0 %v101
  %141 = vmatmul.bf16.gmra.mxu0 %v131
  %v142 = vpop.f32.mrf.mxu0
  %v143 = vadd.f32 %v38, %v142
  %v144 = vpop.f32.mrf.mxu0
  %v145 = vadd.f32 %v38, %v144
  %146 = vdwg.mxu0
  %147 = vmatpush.bf16.msra.mxu0 0
  %148 = vmatpush.bf16.msra.mxu0 0
  %149 = vmatpush.bf16.msra.mxu0 0
  %150 = vmatpush.bf16.msra.mxu0 0
  %151 = vmatpush.bf16.msra.mxu0 0
  %152 = vmatpush.bf16.msra.mxu0 0
  %153 = vmatpush.bf16.msra.mxu0 %v109
  %154 = vmatpush.bf16.msra.mxu0 %v102
  %155 = vmatmul.bf16.gmra.mxu0 %v131
  %v156 = vpop.f32.mrf.mxu0
  %v157 = vadd.f32 %v39, %v156
  %v158 = vpop.f32.mrf.mxu0
  %v159 = vadd.f32 %v39, %v158
  %160 = vdwg.mxu0
  %161 = vmatpush.bf16.msra.mxu0 0
  %162 = vmatpush.bf16.msra.mxu0 0
  %163 = vmatpush.bf16.msra.mxu0 0
  %164 = vmatpush.bf16.msra.mxu0 0
  %165 = vmatpush.bf16.msra.mxu0 0
  %166 = vmatpush.bf16.msra.mxu0 0
  %167 = vmatpush.bf16.msra.mxu0 %v110
  %168 = vmatpush.bf16.msra.mxu0 %v103
  %169 = vmatmul.bf16.gmra.mxu0 %v131
  %v170 = vpop.f32.mrf.mxu0
  %v171 = vadd.f32 %v40, %v170
  %v172 = vpop.f32.mrf.mxu0
  %v173 = vadd.f32 %v40, %v172
  %174 = vdwg.mxu0
  %175 = vmatpush.bf16.msra.mxu0 0
  %176 = vmatpush.bf16.msra.mxu0 0
  %177 = vmatpush.bf16.msra.mxu0 0
  %178 = vmatpush.bf16.msra.mxu0 0
  %179 = vmatpush.bf16.msra.mxu0 0
  %180 = vmatpush.bf16.msra.mxu0 0
  %181 = vmatpush.bf16.msra.mxu0 %v111
  %182 = vmatpush.bf16.msra.mxu0 %v104
  %183 = vmatmul.bf16.gmra.mxu0 %v131
  %v184 = vpop.f32.mrf.mxu0
  %v185 = vadd.f32 %v41, %v184
  %v186 = vpop.f32.mrf.mxu0
  %v187 = vadd.f32 %v41, %v186
  %188 = vdwg.mxu0
  %189 = vmatpush.bf16.msra.mxu0 0
  %190 = vmatpush.bf16.msra.mxu0 0
  %191 = vmatpush.bf16.msra.mxu0 0
  %192 = vmatpush.bf16.msra.mxu0 0
  %193 = vmatpush.bf16.msra.mxu0 0
  %194 = vmatpush.bf16.msra.mxu0 0
  %195 = vmatpush.bf16.msra.mxu0 %v112
  %196 = vmatpush.bf16.msra.mxu0 %v105
  %197 = vmatmul.bf16.gmra.mxu0 %v131
  %v198 = vpop.f32.mrf.mxu0
  %v199 = vadd.f32 %v42, %v198
  %v200 = vpop.f32.mrf.mxu0
  %v201 = vadd.f32 %v42, %v200
  %202 = vdwg.mxu0
  %203 = vmatpush.bf16.msra.mxu0 0
  %204 = vmatpush.bf16.msra.mxu0 0
  %205 = vmatpush.bf16.msra.mxu0 0
  %206 = vmatpush.bf16.msra.mxu0 0
  %207 = vmatpush.bf16.msra.mxu0 0
  %208 = vmatpush.bf16.msra.mxu0 0
  %209 = vmatpush.bf16.msra.mxu0 %v113
  %210 = vmatpush.bf16.msra.mxu0 %v106
  %211 = vmatmul.bf16.gmra.mxu0 %v131
  %v212 = vpop.f32.mrf.mxu0
  %v213 = vadd.f32 %v43, %v212
  %v214 = vpop.f32.mrf.mxu0
  %v215 = vadd.f32 %v43, %v214
  %216 = vdwg.mxu0
  %217 = vmatpush.bf16.msra.mxu0 0
  %218 = vmatpush.bf16.msra.mxu0 0
  %219 = vmatpush.bf16.msra.mxu0 0
  %220 = vmatpush.bf16.msra.mxu0 0
  %221 = vmatpush.bf16.msra.mxu0 0
  %222 = vmatpush.bf16.msra.mxu0 0
  %223 = vmatpush.bf16.msra.mxu0 %v114
  %224 = vmatpush.bf16.msra.mxu0 %v107
  %225 = vmatmul.bf16.gmra.mxu0 %v131
  %v226 = vpop.f32.mrf.mxu0
  %v227 = vadd.f32 %v44, %v226
  %v228 = vpop.f32.mrf.mxu0
  %v229 = vadd.f32 %v44, %v228
  %230 = vdwg.mxu0
  %v231 = vld [vmem:[%s3] sm:$0xff]
  %vm232 = vcmp.gt.f32.partialorder %v231, 0.0
  %v233 = vmax.f32 %v143, 0.0
  %v234 = vmax.f32 %v157, 0.0
  %v235 = vmax.f32 %v171, 0.0
  %v236 = vmax.f32 %v185, 0.0
  %v237 = vmax.f32 %v199, 0.0
  %v238 = vmax.f32 %v213, 0.0
  %v239 = vmax.f32 %v227, 0.0
  %v240 = vmax.f32 %v145, 0.0
  %v241 = vmax.f32 %v159, 0.0
  %v242 = vmax.f32 %v173, 0.0
  %v243 = vmax.f32 %v187, 0.0
  %v244 = vmax.f32 %v201, 0.0
  %v245 = vmax.f32 %v215, 0.0
  %v246 = vmax.f32 %v229, 0.0
  %v247 = vsel %vm232, 1, 0
  %v248 = vperm.slane %v247, 0
  %v249 = vperm.slane %v247, 1
  %v250 = vperm.slane %v247, 2
  %v251 = vperm.slane %v247, 3
  %v252 = vperm.slane %v247, 4
  %v253 = vperm.slane %v247, 5
  %v254 = vperm.slane %v247, 6
  %vm255 = vcmp.eq.s32.totalorder %v248, 1
  %vm256 = vcmp.eq.s32.totalorder %v249, 1
  %vm257 = vcmp.eq.s32.totalorder %v250, 1
  %vm258 = vcmp.eq.s32.totalorder %v251, 1
  %vm259 = vcmp.eq.s32.totalorder %v252, 1
  %vm260 = vcmp.eq.s32.totalorder %v253, 1
  %vm261 = vcmp.eq.s32.totalorder %v254, 1
  %v262 = vsel %vm255, %v233, %v143
  %v263 = vsel %vm256, %v234, %v157
  %v264 = vsel %vm257, %v235, %v171
  %v265 = vsel %vm258, %v236, %v185
  %v266 = vsel %vm259, %v237, %v199
  %v267 = vsel %vm260, %v238, %v213
  %v268 = vsel %vm261, %v239, %v227
  %v269 = vsel %vm255, %v240, %v145
  %v270 = vsel %vm256, %v241, %v159
  %v271 = vsel %vm257, %v242, %v173
  %v272 = vsel %vm258, %v243, %v187
  %v273 = vsel %vm259, %v244, %v201
  %v274 = vsel %vm260, %v245, %v215
  %v275 = vsel %vm261, %v246, %v229
  %v276 = vpack.c.bf16 %v263, %v262
  %v277 = vpack.c.bf16 %v265, %v264
  %v278 = vpack.c.bf16 %v267, %v266
  %v279 = vpack.c.bf16 %v268, %v268
  %v280 = vpack.c.bf16 %v270, %v269
  %v281 = vpack.c.bf16 %v272, %v271
  %v282 = vpack.c.bf16 %v274, %v273
  %v283 = vpack.c.bf16 %v275, %v275
  %284 = vst [vmem:[%s4] sm:$0xff] %v276
  %285 = vst [vmem:[%s4 + $0x8] sm:$0xff] %v277
  %286 = vst [vmem:[%s4 + $0x10] sm:$0xff] %v278
  %287 = vst [vmem:[%s4 + $0x18] sm:$0xf] %v279
  %288 = vst [vmem:[%s4 + $0x1c] sm:$0xff] %v280
  %289 = vst [vmem:[%s4 + $0x24] sm:$0xff] %v281
  %290 = vst [vmem:[%s4 + $0x2c] sm:$0xff] %v282
  %291 = vst [vmem:[%s4 + $0x34] sm:$0xf] %v283
  // Predicated region
  $region18: #{bayes_model_forward.9} parent=0 // pred_check
    _
  $region19: #{bayes_model_forward.9} parent=0 // pred_check_branch
    %293 = sbr.rel (0) target = $region21
  $region20: #{bayes_model_forward.9} parent=0 // pred_region
    _
  $region21: #{bayes_model_forward.9} parent=0 // pred_fallthru
    _
  // Predicated region
  $region22: #{bayes_model_forward.9} parent=0 // pred_check
    _
  $region23: #{bayes_model_forward.9} parent=0 // pred_check_branch
    %295 = sbr.rel (0) target = $region25
  $region24: #{bayes_model_forward.9} parent=0 // pred_region
    _
  $region25: #{bayes_model_forward.9} parent=0 // pred_fallthru
    _

// kernel: bayes_model_forward.8
$region0: #{bayes_model_forward.8}
  #allocation0 [shape = 'u32[]', space=smem, size = 0x4, offset = 0x4, fixed_abs, tag = 'smem constant byte address 0x4 - core index']
  #allocation1 [shape = 'u32[72,128]{1,0:T(1,128)}', space=vmem, size = 0x9000, scoped, tag = 'internal scratch']
  %s0 = inlined_call_operand.vmem [shape: bf16[16,794], index: 0, kind: input, shape index: {}]
  %s1 = inlined_call_operand.vmem [shape: bf16[794,128], index: 1, kind: input, shape index: {}]
  %s2 = inlined_call_operand.vmem [shape: f32[1,128], index: 2, kind: input, shape index: {}]
  %s3 = inlined_call_operand.vmem [shape: f32[16,128], index: 3, kind: output, shape index: {}]
  %s4 = sld [smem:[#allocation0]]
  $region22: #{bayes_model_forward.8} parent=0
    _
  %s6 = ssub.s32 1, %s4
  %s7 = scalar_select 0, %s6, %s4
  // Predicated region
  $region2: #{bayes_model_forward.8} parent=0 // pred_check
    _
  $region3: #{bayes_model_forward.8} parent=0 // pred_check_branch
    %9 = sbr.rel (0) target = $region5
  $region4: #{bayes_model_forward.8} parent=0 // pred_region
    _
  $region5: #{bayes_model_forward.8} parent=0 // pred_fallthru
    _
  // Predicated region
  $region6: #{bayes_model_forward.8} parent=0 // pred_check
    _
  $region7: #{bayes_model_forward.8} parent=0 // pred_check_branch
    %11 = sbr.rel (0) target = $region9
  $region8: #{bayes_model_forward.8} parent=0 // pred_region
    _
  $region9: #{bayes_model_forward.8} parent=0 // pred_fallthru
    _
  // Predicated region
  $region10: #{bayes_model_forward.8} parent=0 // pred_check
    _
  $region11: #{bayes_model_forward.8} parent=0 // pred_check_branch
    %13 = sbr.rel (0) target = $region13
  $region12: #{bayes_model_forward.8} parent=0 // pred_region
    _
  $region13: #{bayes_model_forward.8} parent=0 // pred_fallthru
    _
  %v15 = vld [vmem:[%s0] sm:$0xff]
  %v16 = vld [vmem:[%s0 + $0x8] sm:$0xff]
  %v17 = vld [vmem:[%s0 + $0x10] sm:$0xff]
  %v18 = vld [vmem:[%s0 + $0x18] sm:$0xf]
  %v19 = vld [vmem:[%s0 + $0x1c] sm:$0xff]
  %v20 = vld [vmem:[%s0 + $0x24] sm:$0xff]
  %v21 = vld [vmem:[%s0 + $0x2c] sm:$0xff]
  %v22 = vld [vmem:[%s0 + $0x34] sm:$0xf]
  %v23 = vld [vmem:[%s1] sm:$0xf]
  %v24 = vld [vmem:[%s1 + $0x4] sm:$0xf]
  %v25 = vld [vmem:[%s1 + $0x8] sm:$0xf]
  %v26 = vld [vmem:[%s1 + $0xc] sm:$0xf]
  %v27 = vld [vmem:[%s1 + $0x10] sm:$0xf]
  %v28 = vld [vmem:[%s1 + $0x14] sm:$0xf]
  %v29 = vld [vmem:[%s1 + $0x18] sm:$0xf]
  %v30 = vld [vmem:[%s1 + $0x1c] sm:$0xf]
  %v31 = vld [vmem:[%s1 + $0x20] sm:$0xf]
  %v32 = vld [vmem:[%s1 + $0x24] sm:$0xf]
  %v33 = vld [vmem:[%s1 + $0x28] sm:$0xf]
  %v34 = vld [vmem:[%s1 + $0x2c] sm:$0xf]
  %v35 = vld [vmem:[%s1 + $0x30] sm:$0xf]
  %v36 = vld [vmem:[%s1 + $0x34] sm:$0xf]
  %v37 = vld [vmem:[%s1 + $0x38] sm:$0xf]
  %v38 = vld [vmem:[%s1 + $0x3c] sm:$0xf]
  %v39 = vld [vmem:[%s1 + $0x40] sm:$0xf]
  %v40 = vld [vmem:[%s1 + $0x44] sm:$0xf]
  %v41 = vld [vmem:[%s1 + $0x48] sm:$0xf]
  %v42 = vld [vmem:[%s1 + $0x4c] sm:$0xf]
  %v43 = vld [vmem:[%s1 + $0x50] sm:$0xf]
  %v44 = vld [vmem:[%s1 + $0x54] sm:$0xf]
  %v45 = vld [vmem:[%s1 + $0x58] sm:$0xf]
  %v46 = vld [vmem:[%s1 + $0x5c] sm:$0xf]
  %v47 = vld [vmem:[%s1 + $0x60] sm:$0xf]
  %v48 = vld [vmem:[%s1 + $0x64] sm:$0xf]
  %v49 = vld [vmem:[%s1 + $0x68] sm:$0xf]
  %v50 = vld [vmem:[%s1 + $0x6c] sm:$0xf]
  %v51 = vld [vmem:[%s1 + $0x70] sm:$0xf]
  %v52 = vld [vmem:[%s1 + $0x74] sm:$0xf]
  %v53 = vld [vmem:[%s1 + $0x78] sm:$0xf]
  %v54 = vld [vmem:[%s1 + $0x7c] sm:$0xf]
  %v55 = vld [vmem:[%s1 + $0x80] sm:$0xf]
  %v56 = vld [vmem:[%s1 + $0x84] sm:$0xf]
  %v57 = vld [vmem:[%s1 + $0x88] sm:$0xf]
  %v58 = vld [vmem:[%s1 + $0x8c] sm:$0xf]
  %v59 = vld [vmem:[%s1 + $0x90] sm:$0xf]
  %v60 = vld [vmem:[%s1 + $0x94] sm:$0xf]
  %v61 = vld [vmem:[%s1 + $0x98] sm:$0xf]
  %v62 = vld [vmem:[%s1 + $0x9c] sm:$0xf]
  %v63 = vld [vmem:[%s1 + $0xa0] sm:$0xf]
  %v64 = vld [vmem:[%s1 + $0xa4] sm:$0xf]
  %v65 = vld [vmem:[%s1 + $0xa8] sm:$0xf]
  %v66 = vld [vmem:[%s1 + $0xac] sm:$0xf]
  %v67 = vld [vmem:[%s1 + $0xb0] sm:$0xf]
  %v68 = vld [vmem:[%s1 + $0xb4] sm:$0xf]
  %v69 = vld [vmem:[%s1 + $0xb8] sm:$0xf]
  %v70 = vld [vmem:[%s1 + $0xbc] sm:$0xf]
  %v71 = vld [vmem:[%s1 + $0xc0] sm:$0xf]
  %v72 = vld [vmem:[%s1 + $0xc4] sm:$0xf]
  %v73 = vld [vmem:[%s1 + $0xc8] sm:$0xf]
  %v74 = vld [vmem:[%s1 + $0xcc] sm:$0xf]
  %v75 = vld [vmem:[%s1 + $0xd0] sm:$0xf]
  %v76 = vld [vmem:[%s1 + $0xd4] sm:$0xf]
  %v77 = vld [vmem:[%s1 + $0xd8] sm:$0xf]
  %v78 = vld [vmem:[%s1 + $0xdc] sm:$0xf]
  %v79 = vld [vmem:[%s1 + $0xe0] sm:$0xf]
  %v80 = vld [vmem:[%s1 + $0xe4] sm:$0xf]
  %v81 = vld [vmem:[%s1 + $0xe8] sm:$0xf]
  %v82 = vld [vmem:[%s1 + $0xec] sm:$0xf]
  %v83 = vld [vmem:[%s1 + $0xf0] sm:$0xf]
  %v84 = vld [vmem:[%s1 + $0xf4] sm:$0xf]
  %v85 = vld [vmem:[%s1 + $0xf8] sm:$0xf]
  %v86 = vld [vmem:[%s1 + $0xfc] sm:$0xf]
  %v87 = vld [vmem:[%s1 + $0x100] sm:$0xf]
  %v88 = vld [vmem:[%s1 + $0x104] sm:$0xf]
  %v89 = vld [vmem:[%s1 + $0x108] sm:$0xf]
  %v90 = vld [vmem:[%s1 + $0x10c] sm:$0xf]
  %v91 = vld [vmem:[%s1 + $0x110] sm:$0xf]
  %v92 = vld [vmem:[%s1 + $0x114] sm:$0xf]
  %v93 = vld [vmem:[%s1 + $0x118] sm:$0xf]
  %v94 = vld [vmem:[%s1 + $0x11c] sm:$0xf]
  %v95 = vld [vmem:[%s1 + $0x120] sm:$0xf]
  %v96 = vld [vmem:[%s1 + $0x124] sm:$0xf]
  %v97 = vld [vmem:[%s1 + $0x128] sm:$0xf]
  %v98 = vld [vmem:[%s1 + $0x12c] sm:$0xf]
  %v99 = vld [vmem:[%s1 + $0x130] sm:$0xf]
  %v100 = vld [vmem:[%s1 + $0x134] sm:$0xf]
  %v101 = vld [vmem:[%s1 + $0x138] sm:$0xf]
  %v102 = vld [vmem:[%s1 + $0x13c] sm:$0xf]
  %v103 = vld [vmem:[%s1 + $0x140] sm:$0xf]
  %v104 = vld [vmem:[%s1 + $0x144] sm:$0xf]
  %v105 = vld [vmem:[%s1 + $0x148] sm:$0xf]
  %v106 = vld [vmem:[%s1 + $0x14c] sm:$0xf]
  %v107 = vld [vmem:[%s1 + $0x150] sm:$0xf]
  %v108 = vld [vmem:[%s1 + $0x154] sm:$0xf]
  %v109 = vld [vmem:[%s1 + $0x158] sm:$0xf]
  %v110 = vld [vmem:[%s1 + $0x15c] sm:$0xf]
  %v111 = vld [vmem:[%s1 + $0x160] sm:$0xf]
  %v112 = vld [vmem:[%s1 + $0x164] sm:$0xf]
  %v113 = vld [vmem:[%s1 + $0x168] sm:$0xf]
  %v114 = vld [vmem:[%s1 + $0x16c] sm:$0xf]
  %v115 = vld [vmem:[%s1 + $0x170] sm:$0xf]
  %v116 = vld [vmem:[%s1 + $0x174] sm:$0xf]
  %v117 = vld [vmem:[%s1 + $0x178] sm:$0xf]
  %v118 = vld [vmem:[%s1 + $0x17c] sm:$0xf]
  %v119 = vld [vmem:[%s1 + $0x180] sm:$0xf]
  %v120 = vld [vmem:[%s1 + $0x184] sm:$0xf]
  %v121 = vld [vmem:[%s1 + $0x188] sm:$0xf]
  %v122 = vld [vmem:[%s1 + $0x18c] sm:$0x1]
  %v123 = vld [vmem:[%s2] sm:$0x1]
  %v125 = vperm.slane %v123, 0
  %v135 = vunpack.c.l.b16 %v15
  %v136 = vunpack.c.h.b16 %v15
  %v137 = vunpack.c.l.b16 %v16
  %v138 = vunpack.c.h.b16 %v16
  %v139 = vunpack.c.l.b16 %v17
  %v140 = vunpack.c.h.b16 %v17
  %v141 = vunpack.c.l.b16 %v18
  %v142 = vunpack.c.l.b16 %v19
  %v143 = vunpack.c.h.b16 %v19
  %v144 = vunpack.c.l.b16 %v20
  %v145 = vunpack.c.h.b16 %v20
  %v146 = vunpack.c.l.b16 %v21
  %v147 = vunpack.c.h.b16 %v21
  %v148 = vunpack.c.l.b16 %v22
  %v149 = vpack.c.b16 %v142, %v135
  %v150 = vpack.c.b16 %v143, %v136
  %v151 = vpack.c.b16 %v144, %v137
  %v152 = vpack.c.b16 %v145, %v138
  %v153 = vpack.c.b16 %v146, %v139
  %v154 = vpack.c.b16 %v147, %v140
  %v155 = vpack.c.b16 %v148, %v141
  %v262 = vunpack.c.l.b16 %v23
  %v263 = vunpack.c.l.b16 %v24
  %v264 = vunpack.c.l.b16 %v25
  %v265 = vunpack.c.l.b16 %v26
  %v266 = vunpack.c.l.b16 %v27
  %v267 = vunpack.c.l.b16 %v28
  %v268 = vunpack.c.l.b16 %v29
  %v269 = vunpack.c.l.b16 %v30
  %v270 = vunpack.c.l.b16 %v31
  %v271 = vunpack.c.l.b16 %v32
  %v272 = vunpack.c.l.b16 %v33
  %v273 = vunpack.c.l.b16 %v34
  %v274 = vunpack.c.l.b16 %v35
  %v275 = vunpack.c.l.b16 %v36
  %v276 = vunpack.c.l.b16 %v37
  %v277 = vunpack.c.l.b16 %v38
  %v278 = vunpack.c.l.b16 %v39
  %v279 = vunpack.c.l.b16 %v40
  %v280 = vunpack.c.l.b16 %v41
  %v281 = vunpack.c.l.b16 %v42
  %v282 = vunpack.c.l.b16 %v43
  %v283 = vunpack.c.l.b16 %v44
  %v284 = vunpack.c.l.b16 %v45
  %v285 = vunpack.c.l.b16 %v46
  %v286 = vunpack.c.l.b16 %v47
  %v287 = vunpack.c.l.b16 %v48
  %v288 = vunpack.c.l.b16 %v49
  %v289 = vunpack.c.l.b16 %v50
  %v290 = vunpack.c.l.b16 %v51
  %v291 = vunpack.c.l.b16 %v52
  %v292 = vunpack.c.l.b16 %v53
  %v293 = vunpack.c.l.b16 %v54
  %v294 = vunpack.c.l.b16 %v55
  %v295 = vunpack.c.l.b16 %v56
  %v296 = vunpack.c.l.b16 %v57
  %v297 = vunpack.c.l.b16 %v58
  %v298 = vunpack.c.l.b16 %v59
  %v299 = vunpack.c.l.b16 %v60
  %v300 = vunpack.c.l.b16 %v61
  %v301 = vunpack.c.l.b16 %v62
  %v302 = vunpack.c.l.b16 %v63
  %v303 = vunpack.c.l.b16 %v64
  %v304 = vunpack.c.l.b16 %v65
  %v305 = vunpack.c.l.b16 %v66
  %v306 = vunpack.c.l.b16 %v67
  %v307 = vunpack.c.l.b16 %v68
  %v308 = vunpack.c.l.b16 %v69
  %v309 = vunpack.c.l.b16 %v70
  %v310 = vunpack.c.l.b16 %v71
  %v311 = vunpack.c.l.b16 %v72
  %v312 = vunpack.c.l.b16 %v73
  %v313 = vunpack.c.l.b16 %v74
  %v314 = vunpack.c.l.b16 %v75
  %v315 = vunpack.c.l.b16 %v76
  %v316 = vunpack.c.l.b16 %v77
  %v317 = vunpack.c.l.b16 %v78
  %v318 = vunpack.c.l.b16 %v79
  %v319 = vunpack.c.l.b16 %v80
  %v320 = vunpack.c.l.b16 %v81
  %v321 = vunpack.c.l.b16 %v82
  %v322 = vunpack.c.l.b16 %v83
  %v323 = vunpack.c.l.b16 %v84
  %v324 = vunpack.c.l.b16 %v85
  %v325 = vunpack.c.l.b16 %v86
  %v326 = vunpack.c.l.b16 %v87
  %v327 = vunpack.c.l.b16 %v88
  %v328 = vunpack.c.l.b16 %v89
  %v329 = vunpack.c.l.b16 %v90
  %v330 = vunpack.c.l.b16 %v91
  %v331 = vunpack.c.l.b16 %v92
  %v332 = vunpack.c.l.b16 %v93
  %v333 = vunpack.c.l.b16 %v94
  %v334 = vunpack.c.l.b16 %v95
  %v335 = vunpack.c.l.b16 %v96
  %v336 = vunpack.c.l.b16 %v97
  %v337 = vunpack.c.l.b16 %v98
  %v338 = vunpack.c.l.b16 %v99
  %v339 = vunpack.c.l.b16 %v100
  %v340 = vunpack.c.l.b16 %v101
  %v341 = vunpack.c.l.b16 %v102
  %v342 = vunpack.c.l.b16 %v103
  %v343 = vunpack.c.l.b16 %v104
  %v344 = vunpack.c.l.b16 %v105
  %v345 = vunpack.c.l.b16 %v106
  %v346 = vunpack.c.l.b16 %v107
  %v347 = vunpack.c.l.b16 %v108
  %v348 = vunpack.c.l.b16 %v109
  %v349 = vunpack.c.l.b16 %v110
  %v350 = vunpack.c.l.b16 %v111
  %v351 = vunpack.c.l.b16 %v112
  %v352 = vunpack.c.l.b16 %v113
  %v353 = vunpack.c.l.b16 %v114
  %v354 = vunpack.c.l.b16 %v115
  %v355 = vunpack.c.l.b16 %v116
  %v356 = vunpack.c.l.b16 %v117
  %v357 = vunpack.c.l.b16 %v118
  %v358 = vunpack.c.l.b16 %v119
  %v359 = vunpack.c.l.b16 %v120
  %v360 = vunpack.c.l.b16 %v121
  %v361 = vunpack.c.l.b16 %v122
  %v362 = vpack.c.b16 %v263, %v262
  %v363 = vpack.c.b16 %v265, %v264
  %v364 = vpack.c.b16 %v267, %v266
  %v365 = vpack.c.b16 %v269, %v268
  %v366 = vpack.c.b16 %v271, %v270
  %v367 = vpack.c.b16 %v273, %v272
  %v368 = vpack.c.b16 %v275, %v274
  %v369 = vpack.c.b16 %v277, %v276
  %v370 = vpack.c.b16 %v279, %v278
  %v371 = vpack.c.b16 %v281, %v280
  %v372 = vpack.c.b16 %v283, %v282
  %v373 = vpack.c.b16 %v285, %v284
  %v374 = vpack.c.b16 %v287, %v286
  %v375 = vpack.c.b16 %v289, %v288
  %v376 = vpack.c.b16 %v291, %v290
  %v377 = vpack.c.b16 %v293, %v292
  %v378 = vpack.c.b16 %v295, %v294
  %v379 = vpack.c.b16 %v297, %v296
  %v380 = vpack.c.b16 %v299, %v298
  %v381 = vpack.c.b16 %v301, %v300
  %v382 = vpack.c.b16 %v303, %v302
  %v383 = vpack.c.b16 %v305, %v304
  %v384 = vpack.c.b16 %v307, %v306
  %v385 = vpack.c.b16 %v309, %v308
  %v386 = vpack.c.b16 %v311, %v310
  %v387 = vpack.c.b16 %v313, %v312
  %v388 = vpack.c.b16 %v315, %v314
  %v389 = vpack.c.b16 %v317, %v316
  %v390 = vpack.c.b16 %v319, %v318
  %v391 = vpack.c.b16 %v321, %v320
  %v392 = vpack.c.b16 %v323, %v322
  %v393 = vpack.c.b16 %v325, %v324
  %v394 = vpack.c.b16 %v327, %v326
  %v395 = vpack.c.b16 %v329, %v328
  %v396 = vpack.c.b16 %v331, %v330
  %v397 = vpack.c.b16 %v333, %v332
  %v398 = vpack.c.b16 %v335, %v334
  %v399 = vpack.c.b16 %v337, %v336
  %v400 = vpack.c.b16 %v339, %v338
  %v401 = vpack.c.b16 %v341, %v340
  %v402 = vpack.c.b16 %v343, %v342
  %v403 = vpack.c.b16 %v345, %v344
  %v404 = vpack.c.b16 %v347, %v346
  %v405 = vpack.c.b16 %v349, %v348
  %v406 = vpack.c.b16 %v351, %v350
  %v407 = vpack.c.b16 %v353, %v352
  %v408 = vpack.c.b16 %v355, %v354
  %v409 = vpack.c.b16 %v357, %v356
  %v410 = vpack.c.b16 %v359, %v358
  %v411 = vpack.c.b16 %v361, %v360
  %vm461 = vcmask 211968
  %v463 = vsel %vm461, %v155, 0
  %vm465 = vcmask 1044480
  %v467 = vsel %vm465, %v411, 0
  %469 = vmatpush.bf16.msra.mxu0 %v369
  %470 = vmatpush.bf16.msra.mxu0 %v368
  %471 = vmatpush.bf16.msra.mxu0 %v367
  %472 = vmatpush.bf16.msra.mxu0 %v366
  %473 = vmatpush.bf16.msra.mxu0 %v365
  %474 = vmatpush.bf16.msra.mxu0 %v364
  %475 = vmatpush.bf16.msra.mxu0 %v363
  %476 = vmatpush.bf16.msra.mxu0 %v362
  %477 = vmatmul.bf16.gmra.mxu0 %v149
  %v478 = vpop.f32.mrf.mxu0
  %v479 = vadd.f32 %v125, %v478
  %v480 = vpop.f32.mrf.mxu0
  %v481 = vadd.f32 %v125, %v480
  %482 = vdwg.mxu0
  %483 = vmatpush.bf16.msra.mxu0 %v377
  %484 = vmatpush.bf16.msra.mxu0 %v376
  %485 = vmatpush.bf16.msra.mxu0 %v375
  %486 = vmatpush.bf16.msra.mxu0 %v374
  %487 = vmatpush.bf16.msra.mxu0 %v373
  %488 = vmatpush.bf16.msra.mxu0 %v372
  %489 = vmatpush.bf16.msra.mxu0 %v371
  %490 = vmatpush.bf16.msra.mxu0 %v370
  %491 = vmatmul.bf16.gmra.mxu0 %v150
  %v492 = vpop.f32.mrf.mxu0
  %v493 = vadd.f32 %v479, %v492
  %v494 = vpop.f32.mrf.mxu0
  %v495 = vadd.f32 %v481, %v494
  %496 = vdwg.mxu0
  %497 = vmatpush.bf16.msra.mxu0 %v385
  %498 = vmatpush.bf16.msra.mxu0 %v384
  %499 = vmatpush.bf16.msra.mxu0 %v383
  %500 = vmatpush.bf16.msra.mxu0 %v382
  %501 = vmatpush.bf16.msra.mxu0 %v381
  %502 = vmatpush.bf16.msra.mxu0 %v380
  %503 = vmatpush.bf16.msra.mxu0 %v379
  %504 = vmatpush.bf16.msra.mxu0 %v378
  %505 = vmatmul.bf16.gmra.mxu0 %v151
  %v506 = vpop.f32.mrf.mxu0
  %v507 = vadd.f32 %v493, %v506
  %v508 = vpop.f32.mrf.mxu0
  %v509 = vadd.f32 %v495, %v508
  %510 = vdwg.mxu0
  %511 = vmatpush.bf16.msra.mxu0 %v393
  %512 = vmatpush.bf16.msra.mxu0 %v392
  %513 = vmatpush.bf16.msra.mxu0 %v391
  %514 = vmatpush.bf16.msra.mxu0 %v390
  %515 = vmatpush.bf16.msra.mxu0 %v389
  %516 = vmatpush.bf16.msra.mxu0 %v388
  %517 = vmatpush.bf16.msra.mxu0 %v387
  %518 = vmatpush.bf16.msra.mxu0 %v386
  %519 = vmatmul.bf16.gmra.mxu0 %v152
  %v520 = vpop.f32.mrf.mxu0
  %v521 = vadd.f32 %v507, %v520
  %v522 = vpop.f32.mrf.mxu0
  %v523 = vadd.f32 %v509, %v522
  %524 = vdwg.mxu0
  %525 = vmatpush.bf16.msra.mxu0 %v401
  %526 = vmatpush.bf16.msra.mxu0 %v400
  %527 = vmatpush.bf16.msra.mxu0 %v399
  %528 = vmatpush.bf16.msra.mxu0 %v398
  %529 = vmatpush.bf16.msra.mxu0 %v397
  %530 = vmatpush.bf16.msra.mxu0 %v396
  %531 = vmatpush.bf16.msra.mxu0 %v395
  %532 = vmatpush.bf16.msra.mxu0 %v394
  %533 = vmatmul.bf16.gmra.mxu0 %v153
  %v534 = vpop.f32.mrf.mxu0
  %v535 = vadd.f32 %v521, %v534
  %v536 = vpop.f32.mrf.mxu0
  %v537 = vadd.f32 %v523, %v536
  %538 = vdwg.mxu0
  %539 = vmatpush.bf16.msra.mxu0 %v409
  %540 = vmatpush.bf16.msra.mxu0 %v408
  %541 = vmatpush.bf16.msra.mxu0 %v407
  %542 = vmatpush.bf16.msra.mxu0 %v406
  %543 = vmatpush.bf16.msra.mxu0 %v405
  %544 = vmatpush.bf16.msra.mxu0 %v404
  %545 = vmatpush.bf16.msra.mxu0 %v403
  %546 = vmatpush.bf16.msra.mxu0 %v402
  %547 = vmatmul.bf16.gmra.mxu0 %v154
  %v548 = vpop.f32.mrf.mxu0
  %v549 = vadd.f32 %v535, %v548
  %v550 = vpop.f32.mrf.mxu0
  %v551 = vadd.f32 %v537, %v550
  %552 = vdwg.mxu0
  %553 = vmatpush.bf16.msra.mxu0 0
  %554 = vmatpush.bf16.msra.mxu0 0
  %555 = vmatpush.bf16.msra.mxu0 0
  %556 = vmatpush.bf16.msra.mxu0 0
  %557 = vmatpush.bf16.msra.mxu0 0
  %558 = vmatpush.bf16.msra.mxu0 0
  %559 = vmatpush.bf16.msra.mxu0 %v467
  %560 = vmatpush.bf16.msra.mxu0 %v410
  %561 = vmatmul.bf16.gmra.mxu0 %v463
  %v562 = vpop.f32.mrf.mxu0
  %v563 = vadd.f32 %v549, %v562
  %v564 = vpop.f32.mrf.mxu0
  %v565 = vadd.f32 %v551, %v564
  %566 = vdwg.mxu0
  %567 = vst [vmem:[%s3] sm:$0xff] %v563
  %568 = vst [vmem:[%s3 + $0x8] sm:$0xff] %v565
  // Predicated region
  $region14: #{bayes_model_forward.8} parent=0 // pred_check
    _
  $region15: #{bayes_model_forward.8} parent=0 // pred_check_branch
    %570 = sbr.rel (0) target = $region17
  $region16: #{bayes_model_forward.8} parent=0 // pred_region
    _
  $region17: #{bayes_model_forward.8} parent=0 // pred_fallthru
    _
  // Predicated region
  $region18: #{bayes_model_forward.8} parent=0 // pred_check
    _
  $region19: #{bayes_model_forward.8} parent=0 // pred_check_branch
    %572 = sbr.rel (0) target = $region21
  $region20: #{bayes_model_forward.8} parent=0 // pred_region
    _
  $region21: #{bayes_model_forward.8} parent=0 // pred_fallthru
    _

// kernel: bayes_model_forward.10
$region0: #{bayes_model_forward.10}
  #allocation0 [shape = 'u32[]', space=smem, size = 0x4, offset = 0x4, fixed_abs, tag = 'smem constant byte address 0x4 - core index']
  #allocation1 [shape = 'u32[72,128]{1,0:T(1,128)}', space=vmem, size = 0x9000, scoped, tag = 'internal scratch']
  %s0 = inlined_call_operand.vmem [shape: bf16[112,16], index: 0, kind: input, shape index: {}]
  %s1 = inlined_call_operand.vmem [shape: bf16[16,128], index: 1, kind: input, shape index: {}]
  %s2 = inlined_call_operand.vmem [shape: bf16[112,128], index: 2, kind: output, shape index: {}]
  %s3 = sld [smem:[#allocation0]]
  $region18: #{bayes_model_forward.10} parent=0
    _
  %s5 = ssub.s32 1, %s3
  %s6 = scalar_select 0, %s5, %s3
  // Predicated region
  $region2: #{bayes_model_forward.10} parent=0 // pred_check
    _
  $region3: #{bayes_model_forward.10} parent=0 // pred_check_branch
    %8 = sbr.rel (0) target = $region5
  $region4: #{bayes_model_forward.10} parent=0 // pred_region
    _
  $region5: #{bayes_model_forward.10} parent=0 // pred_fallthru
    _
  // Predicated region
  $region6: #{bayes_model_forward.10} parent=0 // pred_check
    _
  $region7: #{bayes_model_forward.10} parent=0 // pred_check_branch
    %10 = sbr.rel (0) target = $region9
  $region8: #{bayes_model_forward.10} parent=0 // pred_region
    _
  $region9: #{bayes_model_forward.10} parent=0 // pred_fallthru
    _
  %v12 = vld [vmem:[%s0] sm:$0xf]
  %v13 = vld [vmem:[%s0 + $0x4] sm:$0xf]
  %v14 = vld [vmem:[%s0 + $0x8] sm:$0xf]
  %v15 = vld [vmem:[%s0 + $0xc] sm:$0xf]
  %v16 = vld [vmem:[%s0 + $0x10] sm:$0xf]
  %v17 = vld [vmem:[%s0 + $0x14] sm:$0xf]
  %v18 = vld [vmem:[%s0 + $0x18] sm:$0xf]
  %v19 = vld [vmem:[%s0 + $0x1c] sm:$0xf]
  %v20 = vld [vmem:[%s0 + $0x20] sm:$0xf]
  %v21 = vld [vmem:[%s0 + $0x24] sm:$0xf]
  %v22 = vld [vmem:[%s0 + $0x28] sm:$0xf]
  %v23 = vld [vmem:[%s0 + $0x2c] sm:$0xf]
  %v24 = vld [vmem:[%s0 + $0x30] sm:$0xf]
  %v25 = vld [vmem:[%s0 + $0x34] sm:$0xf]
  %v26 = vld [vmem:[%s1] sm:$0xf]
  %v27 = vld [vmem:[%s1 + $0x4] sm:$0xf]
  %v42 = vunpack.c.l.b16 %v12
  %v43 = vunpack.c.l.b16 %v13
  %v44 = vunpack.c.l.b16 %v14
  %v45 = vunpack.c.l.b16 %v15
  %v46 = vunpack.c.l.b16 %v16
  %v47 = vunpack.c.l.b16 %v17
  %v48 = vunpack.c.l.b16 %v18
  %v49 = vunpack.c.l.b16 %v19
  %v50 = vunpack.c.l.b16 %v20
  %v51 = vunpack.c.l.b16 %v21
  %v52 = vunpack.c.l.b16 %v22
  %v53 = vunpack.c.l.b16 %v23
  %v54 = vunpack.c.l.b16 %v24
  %v55 = vunpack.c.l.b16 %v25
  %v56 = vpack.c.b16 %v43, %v42
  %v57 = vpack.c.b16 %v45, %v44
  %v58 = vpack.c.b16 %v47, %v46
  %v59 = vpack.c.b16 %v49, %v48
  %v60 = vpack.c.b16 %v51, %v50
  %v61 = vpack.c.b16 %v53, %v52
  %v62 = vpack.c.b16 %v55, %v54
  %v65 = vunpack.c.l.b16 %v26
  %v66 = vunpack.c.l.b16 %v27
  %v67 = vpack.c.b16 %v66, %v65
  %vm69 = vcmask 130048
  %v71 = vsel %vm69, %v56, 0
  %v74 = vsel %vm69, %v57, 0
  %v77 = vsel %vm69, %v58, 0
  %v80 = vsel %vm69, %v59, 0
  %v83 = vsel %vm69, %v60, 0
  %v86 = vsel %vm69, %v61, 0
  %v89 = vsel %vm69, %v62, 0
  %91 = vmatpush.bf16.msra.mxu0 0
  %92 = vmatpush.bf16.msra.mxu0 0
  %93 = vmatpush.bf16.msra.mxu0 0
  %94 = vmatpush.bf16.msra.mxu0 0
  %95 = vmatpush.bf16.msra.mxu0 0
  %96 = vmatpush.bf16.msra.mxu0 0
  %97 = vmatpush.bf16.msra.mxu0 0
  %98 = vmatpush.bf16.msra.mxu0 %v67
  %99 = vmatmul.bf16.gmra.mxu0 %v71
  %v100 = vpop.f32.mrf.mxu0
  %v101 = vadd.f32 0.0, %v100
  %v102 = vpop.f32.mrf.mxu0
  %v103 = vadd.f32 0.0, %v102
  %104 = vmatmul.bf16.gmra.mxu0 %v74
  %v105 = vpop.f32.mrf.mxu0
  %v106 = vadd.f32 0.0, %v105
  %v107 = vpop.f32.mrf.mxu0
  %v108 = vadd.f32 0.0, %v107
  %109 = vmatmul.bf16.gmra.mxu0 %v77
  %v110 = vpop.f32.mrf.mxu0
  %v111 = vadd.f32 0.0, %v110
  %v112 = vpop.f32.mrf.mxu0
  %v113 = vadd.f32 0.0, %v112
  %114 = vmatmul.bf16.gmra.mxu0 %v80
  %v115 = vpop.f32.mrf.mxu0
  %v116 = vadd.f32 0.0, %v115
  %v117 = vpop.f32.mrf.mxu0
  %v118 = vadd.f32 0.0, %v117
  %119 = vmatmul.bf16.gmra.mxu0 %v83
  %v120 = vpop.f32.mrf.mxu0
  %v121 = vadd.f32 0.0, %v120
  %v122 = vpop.f32.mrf.mxu0
  %v123 = vadd.f32 0.0, %v122
  %124 = vmatmul.bf16.gmra.mxu0 %v86
  %v125 = vpop.f32.mrf.mxu0
  %v126 = vadd.f32 0.0, %v125
  %v127 = vpop.f32.mrf.mxu0
  %v128 = vadd.f32 0.0, %v127
  %129 = vmatmul.bf16.gmra.mxu0 %v89
  %v130 = vpop.f32.mrf.mxu0
  %v131 = vadd.f32 0.0, %v130
  %v132 = vpop.f32.mrf.mxu0
  %v133 = vadd.f32 0.0, %v132
  %134 = vdwg.mxu0
  %v135 = vpack.c.bf16 %v101, %v101
  %v136 = vpack.c.bf16 %v103, %v103
  %v137 = vpack.c.bf16 %v106, %v106
  %v138 = vpack.c.bf16 %v108, %v108
  %v139 = vpack.c.bf16 %v111, %v111
  %v140 = vpack.c.bf16 %v113, %v113
  %v141 = vpack.c.bf16 %v116, %v116
  %v142 = vpack.c.bf16 %v118, %v118
  %v143 = vpack.c.bf16 %v121, %v121
  %v144 = vpack.c.bf16 %v123, %v123
  %v145 = vpack.c.bf16 %v126, %v126
  %v146 = vpack.c.bf16 %v128, %v128
  %v147 = vpack.c.bf16 %v131, %v131
  %v148 = vpack.c.bf16 %v133, %v133
  %149 = vst [vmem:[%s2] sm:$0xf] %v135
  %150 = vst [vmem:[%s2 + $0x4] sm:$0xf] %v136
  %151 = vst [vmem:[%s2 + $0x8] sm:$0xf] %v137
  %152 = vst [vmem:[%s2 + $0xc] sm:$0xf] %v138
  %153 = vst [vmem:[%s2 + $0x10] sm:$0xf] %v139
  %154 = vst [vmem:[%s2 + $0x14] sm:$0xf] %v140
  %155 = vst [vmem:[%s2 + $0x18] sm:$0xf] %v141
  %156 = vst [vmem:[%s2 + $0x1c] sm:$0xf] %v142
  %157 = vst [vmem:[%s2 + $0x20] sm:$0xf] %v143
  %158 = vst [vmem:[%s2 + $0x24] sm:$0xf] %v144
  %159 = vst [vmem:[%s2 + $0x28] sm:$0xf] %v145
  %160 = vst [vmem:[%s2 + $0x2c] sm:$0xf] %v146
  %161 = vst [vmem:[%s2 + $0x30] sm:$0xf] %v147
  %162 = vst [vmem:[%s2 + $0x34] sm:$0xf] %v148
  // Predicated region
  $region10: #{bayes_model_forward.10} parent=0 // pred_check
    _
  $region11: #{bayes_model_forward.10} parent=0 // pred_check_branch
    %164 = sbr.rel (0) target = $region13
  $region12: #{bayes_model_forward.10} parent=0 // pred_region
    _
  $region13: #{bayes_model_forward.10} parent=0 // pred_fallthru
    _
  // Predicated region
  $region14: #{bayes_model_forward.10} parent=0 // pred_check
    _
  $region15: #{bayes_model_forward.10} parent=0 // pred_check_branch
    %166 = sbr.rel (0) target = $region17
  $region16: #{bayes_model_forward.10} parent=0 // pred_region
    _
  $region17: #{bayes_model_forward.10} parent=0 // pred_fallthru
    _

// kernel: bayes_model_forward.11
$region0: #{bayes_model_forward.11}
  #allocation0 [shape = 'u32[]', space=smem, size = 0x4, offset = 0x4, fixed_abs, tag = 'smem constant byte address 0x4 - core index']
  #allocation1 [shape = 'u32[72,128]{1,0:T(1,128)}', space=vmem, size = 0x9000, scoped, tag = 'internal scratch']
  %s0 = inlined_call_operand.vmem [shape: bf16[400,8], index: 0, kind: input, shape index: {}]
  %s1 = inlined_call_operand.vmem [shape: bf16[8,128], index: 1, kind: input, shape index: {}]
  %s2 = inlined_call_operand.vmem [shape: bf16[400,128], index: 2, kind: output, shape index: {}]
  %s3 = sld [smem:[#allocation0]]
  $region18: #{bayes_model_forward.11} parent=0
    _
  %s5 = ssub.s32 1, %s3
  %s6 = scalar_select 0, %s5, %s3
  // Predicated region
  $region2: #{bayes_model_forward.11} parent=0 // pred_check
    _
  $region3: #{bayes_model_forward.11} parent=0 // pred_check_branch
    %8 = sbr.rel (0) target = $region5
  $region4: #{bayes_model_forward.11} parent=0 // pred_region
    _
  $region5: #{bayes_model_forward.11} parent=0 // pred_fallthru
    _
  // Predicated region
  $region6: #{bayes_model_forward.11} parent=0 // pred_check
    _
  $region7: #{bayes_model_forward.11} parent=0 // pred_check_branch
    %10 = sbr.rel (0) target = $region9
  $region8: #{bayes_model_forward.11} parent=0 // pred_region
    _
  $region9: #{bayes_model_forward.11} parent=0 // pred_fallthru
    _
  %v12 = vld [vmem:[%s0] sm:$0xf]
  %v13 = vld [vmem:[%s0 + $0x4] sm:$0xf]
  %v14 = vld [vmem:[%s0 + $0x8] sm:$0xf]
  %v15 = vld [vmem:[%s0 + $0xc] sm:$0xf]
  %v16 = vld [vmem:[%s0 + $0x10] sm:$0xf]
  %v17 = vld [vmem:[%s0 + $0x14] sm:$0xf]
  %v18 = vld [vmem:[%s0 + $0x18] sm:$0xf]
  %v19 = vld [vmem:[%s0 + $0x1c] sm:$0xf]
  %v20 = vld [vmem:[%s0 + $0x20] sm:$0xf]
  %v21 = vld [vmem:[%s0 + $0x24] sm:$0xf]
  %v22 = vld [vmem:[%s0 + $0x28] sm:$0xf]
  %v23 = vld [vmem:[%s0 + $0x2c] sm:$0xf]
  %v24 = vld [vmem:[%s0 + $0x30] sm:$0xf]
  %v25 = vld [vmem:[%s0 + $0x34] sm:$0xf]
  %v26 = vld [vmem:[%s0 + $0x38] sm:$0xf]
  %v27 = vld [vmem:[%s0 + $0x3c] sm:$0xf]
  %v28 = vld [vmem:[%s0 + $0x40] sm:$0xf]
  %v29 = vld [vmem:[%s0 + $0x44] sm:$0xf]
  %v30 = vld [vmem:[%s0 + $0x48] sm:$0xf]
  %v31 = vld [vmem:[%s0 + $0x4c] sm:$0xf]
  %v32 = vld [vmem:[%s0 + $0x50] sm:$0xf]
  %v33 = vld [vmem:[%s0 + $0x54] sm:$0xf]
  %v34 = vld [vmem:[%s0 + $0x58] sm:$0xf]
  %v35 = vld [vmem:[%s0 + $0x5c] sm:$0xf]
  %v36 = vld [vmem:[%s0 + $0x60] sm:$0xf]
  %v37 = vld [vmem:[%s0 + $0x64] sm:$0xf]
  %v38 = vld [vmem:[%s0 + $0x68] sm:$0xf]
  %v39 = vld [vmem:[%s0 + $0x6c] sm:$0xf]
  %v40 = vld [vmem:[%s0 + $0x70] sm:$0xf]
  %v41 = vld [vmem:[%s0 + $0x74] sm:$0xf]
  %v42 = vld [vmem:[%s0 + $0x78] sm:$0xf]
  %v43 = vld [vmem:[%s0 + $0x7c] sm:$0xf]
  %v44 = vld [vmem:[%s0 + $0x80] sm:$0xf]
  %v45 = vld [vmem:[%s0 + $0x84] sm:$0xf]
  %v46 = vld [vmem:[%s0 + $0x88] sm:$0xf]
  %v47 = vld [vmem:[%s0 + $0x8c] sm:$0xf]
  %v48 = vld [vmem:[%s0 + $0x90] sm:$0xf]
  %v49 = vld [vmem:[%s0 + $0x94] sm:$0xf]
  %v50 = vld [vmem:[%s0 + $0x98] sm:$0xf]
  %v51 = vld [vmem:[%s0 + $0x9c] sm:$0xf]
  %v52 = vld [vmem:[%s0 + $0xa0] sm:$0xf]
  %v53 = vld [vmem:[%s0 + $0xa4] sm:$0xf]
  %v54 = vld [vmem:[%s0 + $0xa8] sm:$0xf]
  %v55 = vld [vmem:[%s0 + $0xac] sm:$0xf]
  %v56 = vld [vmem:[%s0 + $0xb0] sm:$0xf]
  %v57 = vld [vmem:[%s0 + $0xb4] sm:$0xf]
  %v58 = vld [vmem:[%s0 + $0xb8] sm:$0xf]
  %v59 = vld [vmem:[%s0 + $0xbc] sm:$0xf]
  %v60 = vld [vmem:[%s0 + $0xc0] sm:$0xf]
  %v61 = vld [vmem:[%s0 + $0xc4] sm:$0xf]
  %v62 = vld [vmem:[%s1] sm:$0xf]
  %v113 = vunpack.c.l.b16 %v12
  %v114 = vunpack.c.l.b16 %v13
  %v115 = vunpack.c.l.b16 %v14
  %v116 = vunpack.c.l.b16 %v15
  %v117 = vunpack.c.l.b16 %v16
  %v118 = vunpack.c.l.b16 %v17
  %v119 = vunpack.c.l.b16 %v18
  %v120 = vunpack.c.l.b16 %v19
  %v121 = vunpack.c.l.b16 %v20
  %v122 = vunpack.c.l.b16 %v21
  %v123 = vunpack.c.l.b16 %v22
  %v124 = vunpack.c.l.b16 %v23
  %v125 = vunpack.c.l.b16 %v24
  %v126 = vunpack.c.l.b16 %v25
  %v127 = vunpack.c.l.b16 %v26
  %v128 = vunpack.c.l.b16 %v27
  %v129 = vunpack.c.l.b16 %v28
  %v130 = vunpack.c.l.b16 %v29
  %v131 = vunpack.c.l.b16 %v30
  %v132 = vunpack.c.l.b16 %v31
  %v133 = vunpack.c.l.b16 %v32
  %v134 = vunpack.c.l.b16 %v33
  %v135 = vunpack.c.l.b16 %v34
  %v136 = vunpack.c.l.b16 %v35
  %v137 = vunpack.c.l.b16 %v36
  %v138 = vunpack.c.l.b16 %v37
  %v139 = vunpack.c.l.b16 %v38
  %v140 = vunpack.c.l.b16 %v39
  %v141 = vunpack.c.l.b16 %v40
  %v142 = vunpack.c.l.b16 %v41
  %v143 = vunpack.c.l.b16 %v42
  %v144 = vunpack.c.l.b16 %v43
  %v145 = vunpack.c.l.b16 %v44
  %v146 = vunpack.c.l.b16 %v45
  %v147 = vunpack.c.l.b16 %v46
  %v148 = vunpack.c.l.b16 %v47
  %v149 = vunpack.c.l.b16 %v48
  %v150 = vunpack.c.l.b16 %v49
  %v151 = vunpack.c.l.b16 %v50
  %v152 = vunpack.c.l.b16 %v51
  %v153 = vunpack.c.l.b16 %v52
  %v154 = vunpack.c.l.b16 %v53
  %v155 = vunpack.c.l.b16 %v54
  %v156 = vunpack.c.l.b16 %v55
  %v157 = vunpack.c.l.b16 %v56
  %v158 = vunpack.c.l.b16 %v57
  %v159 = vunpack.c.l.b16 %v58
  %v160 = vunpack.c.l.b16 %v59
  %v161 = vunpack.c.l.b16 %v60
  %v162 = vunpack.c.l.b16 %v61
  %v163 = vpack.c.b16 %v114, %v113
  %v164 = vpack.c.b16 %v116, %v115
  %v165 = vpack.c.b16 %v118, %v117
  %v166 = vpack.c.b16 %v120, %v119
  %v167 = vpack.c.b16 %v122, %v121
  %v168 = vpack.c.b16 %v124, %v123
  %v169 = vpack.c.b16 %v126, %v125
  %v170 = vpack.c.b16 %v128, %v127
  %v171 = vpack.c.b16 %v130, %v129
  %v172 = vpack.c.b16 %v132, %v131
  %v173 = vpack.c.b16 %v134, %v133
  %v174 = vpack.c.b16 %v136, %v135
  %v175 = vpack.c.b16 %v138, %v137
  %v176 = vpack.c.b16 %v140, %v139
  %v177 = vpack.c.b16 %v142, %v141
  %v178 = vpack.c.b16 %v144, %v143
  %v179 = vpack.c.b16 %v146, %v145
  %v180 = vpack.c.b16 %v148, %v147
  %v181 = vpack.c.b16 %v150, %v149
  %v182 = vpack.c.b16 %v152, %v151
  %v183 = vpack.c.b16 %v154, %v153
  %v184 = vpack.c.b16 %v156, %v155
  %v185 = vpack.c.b16 %v158, %v157
  %v186 = vpack.c.b16 %v160, %v159
  %v187 = vpack.c.b16 %v162, %v161
  %vm188 = vcmask 64512
  %v190 = vsel %vm188, %v163, 0
  %v193 = vsel %vm188, %v164, 0
  %v196 = vsel %vm188, %v165, 0
  %v199 = vsel %vm188, %v166, 0
  %v202 = vsel %vm188, %v167, 0
  %v205 = vsel %vm188, %v168, 0
  %v208 = vsel %vm188, %v169, 0
  %v211 = vsel %vm188, %v170, 0
  %v214 = vsel %vm188, %v171, 0
  %v217 = vsel %vm188, %v172, 0
  %v220 = vsel %vm188, %v173, 0
  %v223 = vsel %vm188, %v174, 0
  %v226 = vsel %vm188, %v175, 0
  %v229 = vsel %vm188, %v176, 0
  %v232 = vsel %vm188, %v177, 0
  %v235 = vsel %vm188, %v178, 0
  %v238 = vsel %vm188, %v179, 0
  %v241 = vsel %vm188, %v180, 0
  %v244 = vsel %vm188, %v181, 0
  %v247 = vsel %vm188, %v182, 0
  %v250 = vsel %vm188, %v183, 0
  %v253 = vsel %vm188, %v184, 0
  %v256 = vsel %vm188, %v185, 0
  %v259 = vsel %vm188, %v186, 0
  %v262 = vsel %vm188, %v187, 0
  %vm264 = vcmask 1043456
  %v266 = vsel %vm264, %v62, 0
  %268 = vmatpush.bf16.msra.mxu0 0
  %269 = vmatpush.bf16.msra.mxu0 0
  %270 = vmatpush.bf16.msra.mxu0 0
  %271 = vmatpush.bf16.msra.mxu0 0
  %272 = vmatpush.bf16.msra.mxu0 0
  %273 = vmatpush.bf16.msra.mxu0 0
  %274 = vmatpush.bf16.msra.mxu0 0
  %275 = vmatpush.bf16.msra.mxu0 %v266
  %276 = vmatmul.bf16.gmra.mxu0 %v190
  %v277 = vpop.f32.mrf.mxu0
  %v278 = vadd.f32 0.0, %v277
  %v279 = vpop.f32.mrf.mxu0
  %v280 = vadd.f32 0.0, %v279
  %281 = vmatmul.bf16.gmra.mxu0 %v193
  %v282 = vpop.f32.mrf.mxu0
  %v283 = vadd.f32 0.0, %v282
  %v284 = vpop.f32.mrf.mxu0
  %v285 = vadd.f32 0.0, %v284
  %286 = vmatmul.bf16.gmra.mxu0 %v196
  %v287 = vpop.f32.mrf.mxu0
  %v288 = vadd.f32 0.0, %v287
  %v289 = vpop.f32.mrf.mxu0
  %v290 = vadd.f32 0.0, %v289
  %291 = vmatmul.bf16.gmra.mxu0 %v199
  %v292 = vpop.f32.mrf.mxu0
  %v293 = vadd.f32 0.0, %v292
  %v294 = vpop.f32.mrf.mxu0
  %v295 = vadd.f32 0.0, %v294
  %296 = vmatmul.bf16.gmra.mxu0 %v202
  %v297 = vpop.f32.mrf.mxu0
  %v298 = vadd.f32 0.0, %v297
  %v299 = vpop.f32.mrf.mxu0
  %v300 = vadd.f32 0.0, %v299
  %301 = vmatmul.bf16.gmra.mxu0 %v205
  %v302 = vpop.f32.mrf.mxu0
  %v303 = vadd.f32 0.0, %v302
  %v304 = vpop.f32.mrf.mxu0
  %v305 = vadd.f32 0.0, %v304
  %306 = vmatmul.bf16.gmra.mxu0 %v208
  %v307 = vpop.f32.mrf.mxu0
  %v308 = vadd.f32 0.0, %v307
  %v309 = vpop.f32.mrf.mxu0
  %v310 = vadd.f32 0.0, %v309
  %311 = vmatmul.bf16.gmra.mxu0 %v211
  %v312 = vpop.f32.mrf.mxu0
  %v313 = vadd.f32 0.0, %v312
  %v314 = vpop.f32.mrf.mxu0
  %v315 = vadd.f32 0.0, %v314
  %316 = vmatmul.bf16.gmra.mxu0 %v214
  %v317 = vpop.f32.mrf.mxu0
  %v318 = vadd.f32 0.0, %v317
  %v319 = vpop.f32.mrf.mxu0
  %v320 = vadd.f32 0.0, %v319
  %321 = vmatmul.bf16.gmra.mxu0 %v217
  %v322 = vpop.f32.mrf.mxu0
  %v323 = vadd.f32 0.0, %v322
  %v324 = vpop.f32.mrf.mxu0
  %v325 = vadd.f32 0.0, %v324
  %326 = vmatmul.bf16.gmra.mxu0 %v220
  %v327 = vpop.f32.mrf.mxu0
  %v328 = vadd.f32 0.0, %v327
  %v329 = vpop.f32.mrf.mxu0
  %v330 = vadd.f32 0.0, %v329
  %331 = vmatmul.bf16.gmra.mxu0 %v223
  %v332 = vpop.f32.mrf.mxu0
  %v333 = vadd.f32 0.0, %v332
  %v334 = vpop.f32.mrf.mxu0
  %v335 = vadd.f32 0.0, %v334
  %336 = vmatmul.bf16.gmra.mxu0 %v226
  %v337 = vpop.f32.mrf.mxu0
  %v338 = vadd.f32 0.0, %v337
  %v339 = vpop.f32.mrf.mxu0
  %v340 = vadd.f32 0.0, %v339
  %341 = vmatmul.bf16.gmra.mxu0 %v229
  %v342 = vpop.f32.mrf.mxu0
  %v343 = vadd.f32 0.0, %v342
  %v344 = vpop.f32.mrf.mxu0
  %v345 = vadd.f32 0.0, %v344
  %346 = vmatmul.bf16.gmra.mxu0 %v232
  %v347 = vpop.f32.mrf.mxu0
  %v348 = vadd.f32 0.0, %v347
  %v349 = vpop.f32.mrf.mxu0
  %v350 = vadd.f32 0.0, %v349
  %351 = vmatmul.bf16.gmra.mxu0 %v235
  %v352 = vpop.f32.mrf.mxu0
  %v353 = vadd.f32 0.0, %v352
  %v354 = vpop.f32.mrf.mxu0
  %v355 = vadd.f32 0.0, %v354
  %356 = vmatmul.bf16.gmra.mxu0 %v238
  %v357 = vpop.f32.mrf.mxu0
  %v358 = vadd.f32 0.0, %v357
  %v359 = vpop.f32.mrf.mxu0
  %v360 = vadd.f32 0.0, %v359
  %361 = vmatmul.bf16.gmra.mxu0 %v241
  %v362 = vpop.f32.mrf.mxu0
  %v363 = vadd.f32 0.0, %v362
  %v364 = vpop.f32.mrf.mxu0
  %v365 = vadd.f32 0.0, %v364
  %366 = vmatmul.bf16.gmra.mxu0 %v244
  %v367 = vpop.f32.mrf.mxu0
  %v368 = vadd.f32 0.0, %v367
  %v369 = vpop.f32.mrf.mxu0
  %v370 = vadd.f32 0.0, %v369
  %371 = vmatmul.bf16.gmra.mxu0 %v247
  %v372 = vpop.f32.mrf.mxu0
  %v373 = vadd.f32 0.0, %v372
  %v374 = vpop.f32.mrf.mxu0
  %v375 = vadd.f32 0.0, %v374
  %376 = vmatmul.bf16.gmra.mxu0 %v250
  %v377 = vpop.f32.mrf.mxu0
  %v378 = vadd.f32 0.0, %v377
  %v379 = vpop.f32.mrf.mxu0
  %v380 = vadd.f32 0.0, %v379
  %381 = vmatmul.bf16.gmra.mxu0 %v253
  %v382 = vpop.f32.mrf.mxu0
  %v383 = vadd.f32 0.0, %v382
  %v384 = vpop.f32.mrf.mxu0
  %v385 = vadd.f32 0.0, %v384
  %386 = vmatmul.bf16.gmra.mxu0 %v256
  %v387 = vpop.f32.mrf.mxu0
  %v388 = vadd.f32 0.0, %v387
  %v389 = vpop.f32.mrf.mxu0
  %v390 = vadd.f32 0.0, %v389
  %391 = vmatmul.bf16.gmra.mxu0 %v259
  %v392 = vpop.f32.mrf.mxu0
  %v393 = vadd.f32 0.0, %v392
  %v394 = vpop.f32.mrf.mxu0
  %v395 = vadd.f32 0.0, %v394
  %396 = vmatmul.bf16.gmra.mxu0 %v262
  %v397 = vpop.f32.mrf.mxu0
  %v398 = vadd.f32 0.0, %v397
  %v399 = vpop.f32.mrf.mxu0
  %v400 = vadd.f32 0.0, %v399
  %401 = vdwg.mxu0
  %v402 = vpack.c.bf16 %v278, %v278
  %v403 = vpack.c.bf16 %v280, %v280
  %v404 = vpack.c.bf16 %v283, %v283
  %v405 = vpack.c.bf16 %v285, %v285
  %v406 = vpack.c.bf16 %v288, %v288
  %v407 = vpack.c.bf16 %v290, %v290
  %v408 = vpack.c.bf16 %v293, %v293
  %v409 = vpack.c.bf16 %v295, %v295
  %v410 = vpack.c.bf16 %v298, %v298
  %v411 = vpack.c.bf16 %v300, %v300
  %v412 = vpack.c.bf16 %v303, %v303
  %v413 = vpack.c.bf16 %v305, %v305
  %v414 = vpack.c.bf16 %v308, %v308
  %v415 = vpack.c.bf16 %v310, %v310
  %v416 = vpack.c.bf16 %v313, %v313
  %v417 = vpack.c.bf16 %v315, %v315
  %v418 = vpack.c.bf16 %v318, %v318
  %v419 = vpack.c.bf16 %v320, %v320
  %v420 = vpack.c.bf16 %v323, %v323
  %v421 = vpack.c.bf16 %v325, %v325
  %v422 = vpack.c.bf16 %v328, %v328
  %v423 = vpack.c.bf16 %v330, %v330
  %v424 = vpack.c.bf16 %v333, %v333
  %v425 = vpack.c.bf16 %v335, %v335
  %v426 = vpack.c.bf16 %v338, %v338
  %v427 = vpack.c.bf16 %v340, %v340
  %v428 = vpack.c.bf16 %v343, %v343
  %v429 = vpack.c.bf16 %v345, %v345
  %v430 = vpack.c.bf16 %v348, %v348
  %v431 = vpack.c.bf16 %v350, %v350
  %v432 = vpack.c.bf16 %v353, %v353
  %v433 = vpack.c.bf16 %v355, %v355
  %v434 = vpack.c.bf16 %v358, %v358
  %v435 = vpack.c.bf16 %v360, %v360
  %v436 = vpack.c.bf16 %v363, %v363
  %v437 = vpack.c.bf16 %v365, %v365
  %v438 = vpack.c.bf16 %v368, %v368
  %v439 = vpack.c.bf16 %v370, %v370
  %v440 = vpack.c.bf16 %v373, %v373
  %v441 = vpack.c.bf16 %v375, %v375
  %v442 = vpack.c.bf16 %v378, %v378
  %v443 = vpack.c.bf16 %v380, %v380
  %v444 = vpack.c.bf16 %v383, %v383
  %v445 = vpack.c.bf16 %v385, %v385
  %v446 = vpack.c.bf16 %v388, %v388
  %v447 = vpack.c.bf16 %v390, %v390
  %v448 = vpack.c.bf16 %v393, %v393
  %v449 = vpack.c.bf16 %v395, %v395
  %v450 = vpack.c.bf16 %v398, %v398
  %v451 = vpack.c.bf16 %v400, %v400
  %452 = vst [vmem:[%s2] sm:$0xf] %v402
  %453 = vst [vmem:[%s2 + $0x4] sm:$0xf] %v403
  %454 = vst [vmem:[%s2 + $0x8] sm:$0xf] %v404
  %455 = vst [vmem:[%s2 + $0xc] sm:$0xf] %v405
  %456 = vst [vmem:[%s2 + $0x10] sm:$0xf] %v406
  %457 = vst [vmem:[%s2 + $0x14] sm:$0xf] %v407
  %458 = vst [vmem:[%s2 + $0x18] sm:$0xf] %v408
  %459 = vst [vmem:[%s2 + $0x1c] sm:$0xf] %v409
  %460 = vst [vmem:[%s2 + $0x20] sm:$0xf] %v410
  %461 = vst [vmem:[%s2 + $0x24] sm:$0xf] %v411
  %462 = vst [vmem:[%s2 + $0x28] sm:$0xf] %v412
  %463 = vst [vmem:[%s2 + $0x2c] sm:$0xf] %v413
  %464 = vst [vmem:[%s2 + $0x30] sm:$0xf] %v414
  %465 = vst [vmem:[%s2 + $0x34] sm:$0xf] %v415
  %466 = vst [vmem:[%s2 + $0x38] sm:$0xf] %v416
  %467 = vst [vmem:[%s2 + $0x3c] sm:$0xf] %v417
  %468 = vst [vmem:[%s2 + $0x40] sm:$0xf] %v418
  %469 = vst [vmem:[%s2 + $0x44] sm:$0xf] %v419
  %470 = vst [vmem:[%s2 + $0x48] sm:$0xf] %v420
  %471 = vst [vmem:[%s2 + $0x4c] sm:$0xf] %v421
  %472 = vst [vmem:[%s2 + $0x50] sm:$0xf] %v422
  %473 = vst [vmem:[%s2 + $0x54] sm:$0xf] %v423
  %474 = vst [vmem:[%s2 + $0x58] sm:$0xf] %v424
  %475 = vst [vmem:[%s2 + $0x5c] sm:$0xf] %v425
  %476 = vst [vmem:[%s2 + $0x60] sm:$0xf] %v426
  %477 = vst [vmem:[%s2 + $0x64] sm:$0xf] %v427
  %478 = vst [vmem:[%s2 + $0x68] sm:$0xf] %v428
  %479 = vst [vmem:[%s2 + $0x6c] sm:$0xf] %v429
  %480 = vst [vmem:[%s2 + $0x70] sm:$0xf] %v430
  %481 = vst [vmem:[%s2 + $0x74] sm:$0xf] %v431
  %482 = vst [vmem:[%s2 + $0x78] sm:$0xf] %v432
  %483 = vst [vmem:[%s2 + $0x7c] sm:$0xf] %v433
  %484 = vst [vmem:[%s2 + $0x80] sm:$0xf] %v434
  %485 = vst [vmem:[%s2 + $0x84] sm:$0xf] %v435
  %486 = vst [vmem:[%s2 + $0x88] sm:$0xf] %v436
  %487 = vst [vmem:[%s2 + $0x8c] sm:$0xf] %v437
  %488 = vst [vmem:[%s2 + $0x90] sm:$0xf] %v438
  %489 = vst [vmem:[%s2 + $0x94] sm:$0xf] %v439
  %490 = vst [vmem:[%s2 + $0x98] sm:$0xf] %v440
  %491 = vst [vmem:[%s2 + $0x9c] sm:$0xf] %v441
  %492 = vst [vmem:[%s2 + $0xa0] sm:$0xf] %v442
  %493 = vst [vmem:[%s2 + $0xa4] sm:$0xf] %v443
  %494 = vst [vmem:[%s2 + $0xa8] sm:$0xf] %v444
  %495 = vst [vmem:[%s2 + $0xac] sm:$0xf] %v445
  %496 = vst [vmem:[%s2 + $0xb0] sm:$0xf] %v446
  %497 = vst [vmem:[%s2 + $0xb4] sm:$0xf] %v447
  %498 = vst [vmem:[%s2 + $0xb8] sm:$0xf] %v448
  %499 = vst [vmem:[%s2 + $0xbc] sm:$0xf] %v449
  %500 = vst [vmem:[%s2 + $0xc0] sm:$0xf] %v450
  %501 = vst [vmem:[%s2 + $0xc4] sm:$0xf] %v451
  // Predicated region
  $region10: #{bayes_model_forward.11} parent=0 // pred_check
    _
  $region11: #{bayes_model_forward.11} parent=0 // pred_check_branch
    %503 = sbr.rel (0) target = $region13
  $region12: #{bayes_model_forward.11} parent=0 // pred_region
    _
  $region13: #{bayes_model_forward.11} parent=0 // pred_fallthru
    _
  // Predicated region
  $region14: #{bayes_model_forward.11} parent=0 // pred_check
    _
  $region15: #{bayes_model_forward.11} parent=0 // pred_check_branch
    %505 = sbr.rel (0) target = $region17
  $region16: #{bayes_model_forward.11} parent=0 // pred_region
    _
  $region17: #{bayes_model_forward.11} parent=0 // pred_fallthru
    _

</llo_original>
